<compile_context>
chip_gen: v7x
topology: tpu7x:2x2x1
jax: 0.10.0
libtpu: 0.0.40
codegen_flags: <defaults>
</compile_context>

<pallas_src>
import functools

import jax
import jax.numpy as jnp
from jax import lax
from jax.experimental import pallas as pl
from jax.experimental.pallas import tpu as pltpu


def _dpda_kernel(n_p, n_q, compute_dtype, fuse_linear,
                 p_ref, q_ref, pp_ref, qp_ref,
                 wp_ref, bp_ref, wq_ref, bq_ref,
                 po_ref, qo_ref, pw_ref, qw_ref):
    """Fused per-batch forward.  Elementwise math in f32; MXU fed bf16."""
    f32 = jnp.float32
    cd = compute_dtype
    Dp = p_ref.shape[-1]

    p_in = p_ref[0]                               # (Lp, Dp) native dtype
    q_in = q_ref[0]                               # (Lq, Dp)
    p = p_in.astype(f32)                          # residual / LN path
    q = q_in.astype(f32)
    p_mx = p_in.astype(cd)                        # MXU feed
    q_mx = q_in.astype(cd)

    # A = P @ Q^T  -- contract the feature dims, f32 accumulation.
    A = lax.dot_general(p_mx, q_mx, (((1,), (1,)), ((), ())),
                        preferred_element_type=f32)            # (Lp, Lq)

    # Additive mask penalties (precomputed in the wrapper, right orientation).
    A = A + pp_ref[0] + qp_ref[0]

    # Row / column maxima in their natural orientations -> outputs.
    m_row = jnp.max(A, axis=1, keepdims=True)                  # (Lp, 1)
    m_col = jnp.max(A, axis=0, keepdims=True)                  # (1, Lq)
    pw_ref[0] = m_row
    qw_ref[0] = m_col

    # Manual dual softmax reusing the maxima above; denominators through the
    # EUP reciprocal (separate issue slot).
    # NOTE: deriving e_col from e_row via exp(m_row - m_col) would halve the
    # EUP work but is numerically unsafe with the -10000 mask penalties
    # (masked columns: e_row underflows to 0 while the correction overflows,
    # giving 0/NaN column softmaxes even with clamping) -> keep two exps.
    e_row = jnp.exp(A - m_row)
    e_col = jnp.exp(A - m_col)
    a_q = e_row * pl.reciprocal(jnp.sum(e_row, axis=1, keepdims=True),
                                approx=True)      # softmax(A, axis=-1)
    s_p = e_col * pl.reciprocal(jnp.sum(e_col, axis=0, keepdims=True),
                                approx=True)      # s_p^T == softmax(A^T, -1)

    a_q_mx = a_q.astype(cd)
    s_p_mx = s_p.astype(cd)

    # A_p (= s_p^T) is never materialized: feed it to the MXU through
    # transposed contraction dims instead.
    # TODO(synk): dump Mosaic MLIR to confirm the lhs-dim-0 contractions do
    # not insert a hidden vxpose/relayout of s_p; if they do, materialize
    # s_p^T once (single XLU transpose) and reuse it for both q_p and ap_pq.
    t_lhs = (((0,), (0,)), ((), ()))
    p_q = jnp.dot(a_q_mx, q_mx, preferred_element_type=f32)         # (Lp, Dp)
    q_p = lax.dot_general(s_p_mx, p_mx, t_lhs,
                          preferred_element_type=f32)               # (Lq, Dp)

    p_q_mx = p_q.astype(cd)
    q_p_mx = q_p.astype(cd)

    # Second-hop reads: P_new = [A_q@Q_p, P_q],  Q_new = [A_p@P_q, Q_p].
    aq_qp = jnp.dot(a_q_mx, q_p_mx, preferred_element_type=f32)     # (Lp, Dp)
    ap_pq = lax.dot_general(s_p_mx, p_q_mx, t_lhs,
                            preferred_element_type=f32)             # (Lq, Dp)

    if fuse_linear:
        # Single K = 2*Dp contraction of the feature-concat against the full
        # (2*Dp, Dp) weight -> full depth on the 256-deep v6e/v7x MXUs.
        p_cat = jnp.concatenate([aq_qp.astype(cd), p_q_mx], axis=1)  # (Lp,2Dp)
        q_cat = jnp.concatenate([ap_pq.astype(cd), q_p_mx], axis=1)  # (Lq,2Dp)
        p_lin = jnp.dot(p_cat, wp_ref[...],
                        preferred_element_type=f32) + bp_ref[...]
        q_lin = jnp.dot(q_cat, wq_ref[...],
                        preferred_element_type=f32) + bq_ref[...]
    else:
        # Split-weight form (two K = Dp pushes) -- avoids the concat copy
        # when Dp >= 256 (same number of MXU passes).
        wpa = wp_ref[pl.ds(0, Dp), :]
        wpb = wp_ref[pl.ds(Dp, Dp), :]
        wqa = wq_ref[pl.ds(0, Dp), :]
        wqb = wq_ref[pl.ds(Dp, Dp), :]
        p_lin = (jnp.dot(aq_qp.astype(cd), wpa, preferred_element_type=f32)
                 + jnp.dot(p_q_mx, wpb, preferred_element_type=f32)
                 + bp_ref[...])
        q_lin = (jnp.dot(ap_pq.astype(cd), wqa, preferred_element_type=f32)
                 + jnp.dot(q_p_mx, wqb, preferred_element_type=f32)
                 + bq_ref[...])

    p_res = p + p_lin                              # residual (padded cols = 0)
    q_res = q + q_lin

    # LayerNorm over the whole (L, D) slab, eps=1e-5, no affine.  Single pass
    # (sum + sum of squares) in f32; n is the TRUE element count (L * D), so
    # the zero feature-padding does not bias the statistics.
    def _ln(x, n):
        inv_n = 1.0 / n
        mu = jnp.sum(x) * inv_n
        var = jnp.sum(x * x) * inv_n - mu * mu
        return (x - mu) * lax.rsqrt(var + 1e-5)

    po_ref[0] = _ln(p_res, n_p).astype(po_ref.dtype)
    qo_ref[0] = _ln(q_res, n_q).astype(qo_ref.dtype)


@functools.partial(jax.jit, static_argnames=("compute_dtype",))
def dpda_layer(P, Q, wp_t, bp, wq_t, bq, p_mask=None, q_mask=None,
               *, compute_dtype=jnp.bfloat16):
    """P: (B, Lp, D), Q: (B, Lq, D); wp_t/wq_t: (2D, D) (pre-transposed so
    x @ w == nn.Linear); bp/bq: (D,).  Returns (P, Q, p_weight, q_weight)."""
    B, Lp, D = P.shape
    _, Lq, _ = Q.shape

    if p_mask is None:
        p_mask = jnp.ones((B, Lp), jnp.float32)
    if q_mask is None:
        q_mask = jnp.ones((B, Lq), jnp.float32)

    def _pad_last(x, target):
        d = x.shape[-1]
        if d == target:
            return x
        widths = [(0, 0)] * (x.ndim - 1) + [(0, target - d)]
        return jnp.pad(x, widths)

    # Lane-dense feature dim (exact no-op through matmuls and LN stats).
    # P/Q stay in their NATIVE dtype; the kernel upcasts as needed.
    Dp = max(128, -(-D // 128) * 128)
    Pp = _pad_last(P, Dp)
    Qp = _pad_last(Q, Dp)

    # Additive mask penalties, already in the kernel's broadcast orientation.
    p_pen = ((1.0 - p_mask.astype(jnp.float32)) * -10000.0).reshape(B, Lp, 1)
    q_pen = ((1.0 - q_mask.astype(jnp.float32)) * -10000.0).reshape(B, 1, Lq)

    # One (2*Dp, Dp) weight slab per path: rows [0:Dp] = padded wp_t[:D]
    # (multiplies the A_q@Q_p / A_p@P_q half), rows [Dp:2Dp] = padded
    # wp_t[D:] (multiplies the P_q / Q_p half).  Pre-cast to the MXU dtype.
    def _prep_w(w_t):
        wa = jnp.pad(w_t[:D], ((0, Dp - D), (0, Dp - D)))
        wb = jnp.pad(w_t[D:], ((0, Dp - D), (0, Dp - D)))
        return jnp.concatenate([wa, wb], axis=0).astype(compute_dtype)

    wp_full = _prep_w(wp_t)
    wq_full = _prep_w(wq_t)
    bp2 = _pad_last(bp.reshape(1, D).astype(jnp.float32), Dp)
    bq2 = _pad_last(bq.reshape(1, D).astype(jnp.float32), Dp)

    # Fuse the Linear into one K=2*Dp contraction when Dp == 128 (full depth
    # on the 256-deep v6e/v7x MXUs; on v5e it decomposes to the same two
    # 128-deep passes, so the tiny concat copy is the only cost).
    fuse_linear = (Dp == 128)

    # Generation-aware VMEM budget: per-step footprint (incl. the transient
    # f32 softmax copies) with headroom, capped at 87.5% of physical VMEM
    # (~112 MiB on v5e/v6e, ~56 MiB on v7x).
    in_itm = jnp.dtype(P.dtype).itemsize
    cd_itm = jnp.dtype(compute_dtype).itemsize
    maxL = max(Lp, Lq)
    est_vmem = (
        2 * 2 * (Lp + Lq) * Dp * in_itm            # P/Q in+out blocks, dbl-buffered
        + 2 * (2 * Dp) * Dp * cd_itm               # weight slabs, single-buffered
        + 2 * Dp * 4                               # biases, single-buffered
        + 2 * 2 * (Lp + Lq) * 4                    # mask penalties, dbl-buffered
        + 5 * Lp * Lq * 4 + 2 * Lp * Lq * cd_itm   # A, e_row, e_col, a_q, s_p (+bf16)
        + 12 * maxL * Dp * 4                       # attention / linear intermediates
        + 2 * maxL * 2 * Dp * cd_itm               # fused-linear concat copies
    )
    try:
        vmem_cap = int(pltpu.get_tpu_info().vmem_capacity_bytes)
    except Exception:  # pragma: no cover - conservative fallback
        vmem_cap = 64 * 1024 * 1024
    vmem_limit = int(min(max(int(1.25 * est_vmem), 32 * 1024 * 1024),
                         int(0.875 * vmem_cap)))

    out_shapes = (
        jax.ShapeDtypeStruct((B, Lp, Dp), P.dtype),     # P out (padded D)
        jax.ShapeDtypeStruct((B, Lq, Dp), Q.dtype),     # Q out (padded D)
        jax.ShapeDtypeStruct((B, Lp, 1), jnp.float32),  # p_weight (row max)
        jax.ShapeDtypeStruct((B, 1, Lq), jnp.float32),  # q_weight (col max)
    )

    kern = functools.partial(_dpda_kernel,
                             float(Lp * D), float(Lq * D),
                             compute_dtype, fuse_linear)

    P_out, Q_out, pw3, qw3 = pl.pallas_call(
        kern,
        out_shape=out_shapes,
        grid=(B,),
        in_specs=[
            pl.BlockSpec((1, Lp, Dp), lambda b: (b, 0, 0)),   # P (padded)
            pl.BlockSpec((1, Lq, Dp), lambda b: (b, 0, 0)),   # Q (padded)
            pl.BlockSpec((1, Lp, 1), lambda b: (b, 0, 0)),    # p penalty
            pl.BlockSpec((1, 1, Lq), lambda b: (b, 0, 0)),    # q penalty
            # Invariant operands: single-buffered (constant index_map).
            pl.BlockSpec((2 * Dp, Dp), lambda b: (0, 0),
                         pipeline_mode=pl.Buffered(1)),        # W_p slab
            pl.BlockSpec((1, Dp), lambda b: (0, 0),
                         pipeline_mode=pl.Buffered(1)),        # b_p
            pl.BlockSpec((2 * Dp, Dp), lambda b: (0, 0),
                         pipeline_mode=pl.Buffered(1)),        # W_q slab
            pl.BlockSpec((1, Dp), lambda b: (0, 0),
                         pipeline_mode=pl.Buffered(1)),        # b_q
        ],
        out_specs=[
            pl.BlockSpec((1, Lp, Dp), lambda b: (b, 0, 0)),
            pl.BlockSpec((1, Lq, Dp), lambda b: (b, 0, 0)),
            pl.BlockSpec((1, Lp, 1), lambda b: (b, 0, 0)),
            pl.BlockSpec((1, 1, Lq), lambda b: (b, 0, 0)),
        ],
        compiler_params=pltpu.CompilerParams(
            # Batch axis is independent -> megacore-shardable on v7x.  With
            # B == 1 (or odd B) one TensorCore idles there; fixing that needs
            # the sequence-tiled restructure noted in the module TODO.
            dimension_semantics=("parallel",),
            vmem_limit_bytes=vmem_limit),
    )(Pp, Qp, p_pen, q_pen, wp_full, bp2, wq_full, bq2)

    return (P_out[..., :D], Q_out[..., :D],
            pw3.reshape(B, Lp), qw3.reshape(B, Lq))


def _reference(P, Q, wp_t, bp, wq_t, bq, p_mask, q_mask):
    """Pure-JAX f32 reference mirroring the PyTorch forward exactly."""
    A = jnp.einsum("bpd,bqd->bpq", P, Q)
    A = A + ((1.0 - p_mask) * -10000.0)[:, :, None]
    A = A + ((1.0 - q_mask) * -10000.0)[:, None, :]
    p_weight = jnp.max(A, axis=2)
    q_weight = jnp.max(A, axis=1)
    A_q = jax.nn.softmax(A, axis=2)
    A_p = jax.nn.softmax(jnp.swapaxes(A, 1, 2), axis=2)
    P_q = jnp.einsum("bpq,bqd->bpd", A_q, Q)
    Q_p = jnp.einsum("bqp,bpd->bqd", A_p, P)
    P_t = jnp.concatenate([P_q, P], axis=2)
    Q_t = jnp.concatenate([Q_p, Q], axis=2)
    Q_new = jnp.einsum("bqp,bpd->bqd", A_p, P_t)
    P_new = jnp.einsum("bpq,bqd->bpd", A_q, Q_t)

    def ln(x):
        mu = jnp.mean(x, axis=(1, 2), keepdims=True)
        var = jnp.mean((x - mu) ** 2, axis=(1, 2), keepdims=True)
        return (x - mu) / jnp.sqrt(var + 1e-5)

    P_o = ln(P + (P_new @ wp_t + bp))
    Q_o = ln(Q + (Q_new @ wq_t + bq))
    return P_o, Q_o, p_weight, q_weight


if __name__ == "__main__":
    B, Lp, Lq, D = 2, 8, 8, 32
    key = jax.random.PRNGKey(0)
    kP, kQ, kwp, kbp, kwq, kbq = jax.random.split(key, 6)

    P = jax.random.normal(kP, (B, Lp, D), jnp.float32)
    Q = jax.random.normal(kQ, (B, Lq, D), jnp.float32)

    # PyTorch Linear shapes are (out=D, in=2D); store the transposed weight
    # (2D, D) so the kernel/reference do x @ W^T.
    bound = 1.0 / jnp.sqrt(2.0 * D)
    wp_t = jax.random.uniform(kwp, (2 * D, D), jnp.float32, -bound, bound)
    bp = jax.random.uniform(kbp, (D,), jnp.float32, -bound, bound)
    wq_t = jax.random.uniform(kwq, (2 * D, D), jnp.float32, -bound, bound)
    bq = jax.random.uniform(kbq, (D,), jnp.float32, -bound, bound)

    # Masks with a couple of padded (0) positions to exercise the mask path.
    p_mask = jnp.ones((B, Lp), jnp.float32).at[:, -2:].set(0.0)
    q_mask = jnp.ones((B, Lq), jnp.float32).at[:, -1:].set(0.0)

    P_o, Q_o, pw, qw = dpda_layer(P, Q, wp_t, bp, wq_t, bq, p_mask, q_mask)
    jax.block_until_ready((P_o, Q_o, pw, qw))

    # f32 reference; kernel feeds the MXU bf16 (f32 accumulate) and uses the
    # EUP approx reciprocal, so tolerances are bf16-appropriate.
    P_r, Q_r, pw_r, qw_r = _reference(P, Q, wp_t, bp, wq_t, bq, p_mask, q_mask)
    assert jnp.allclose(P_o, P_r, atol=5e-2, rtol=5e-2), \
        float(jnp.max(jnp.abs(P_o - P_r)))
    assert jnp.allclose(Q_o, Q_r, atol=5e-2, rtol=5e-2), \
        float(jnp.max(jnp.abs(Q_o - Q_r)))
    assert jnp.allclose(pw, pw_r, atol=1e-1, rtol=5e-2), \
        float(jnp.max(jnp.abs(pw - pw_r)))
    assert jnp.allclose(qw, qw_r, atol=1e-1, rtol=5e-2), \
        float(jnp.max(jnp.abs(qw - qw_r)))

    print("KERNEL_OK")
</pallas_src>

<mosaic_0001>
module attributes {stable_mosaic.version = 11 : i64} {
  func.func @_dpda_kernel(%arg0: i32, %arg1: memref<1x8x128xf32, #tpu.memory_space<vmem>>, %arg2: memref<1x8x128xf32, #tpu.memory_space<vmem>>, %arg3: memref<1x8x1xf32, #tpu.memory_space<vmem>>, %arg4: memref<1x1x8xf32, #tpu.memory_space<vmem>>, %arg5: memref<256x128xbf16, #tpu.memory_space<vmem>>, %arg6: memref<1x128xf32, #tpu.memory_space<vmem>>, %arg7: memref<256x128xbf16, #tpu.memory_space<vmem>>, %arg8: memref<1x128xf32, #tpu.memory_space<vmem>>, %arg9: memref<1x8x128xf32, #tpu.memory_space<vmem>>, %arg10: memref<1x8x128xf32, #tpu.memory_space<vmem>>, %arg11: memref<1x8x1xf32, #tpu.memory_space<vmem>>, %arg12: memref<1x1x8xf32, #tpu.memory_space<vmem>>) attributes {dimension_semantics = [#tpu.dimension_semantics<parallel>], iteration_bounds = array<i64: 2>, scalar_prefetch = 0 : i64, scratch_operands = 0 : i64, tpu.core_type = #tpu.core_type<tc>, window_params = [{transform_indices = @transform_0, window_bounds = array<i64: 1, 8, 128>}, {transform_indices = @transform_1, window_bounds = array<i64: 1, 8, 128>}, {transform_indices = @transform_2, window_bounds = array<i64: 1, 8, 1>}, {transform_indices = @transform_3, window_bounds = array<i64: 1, 1, 8>}, {pipeline_mode = #tpu.pipeline_mode<synchronous>, transform_indices = @transform_4, window_bounds = array<i64: 256, 128>}, {pipeline_mode = #tpu.pipeline_mode<synchronous>, transform_indices = @transform_5, window_bounds = array<i64: 1, 128>}, {pipeline_mode = #tpu.pipeline_mode<synchronous>, transform_indices = @transform_6, window_bounds = array<i64: 256, 128>}, {pipeline_mode = #tpu.pipeline_mode<synchronous>, transform_indices = @transform_7, window_bounds = array<i64: 1, 128>}, {transform_indices = @transform_8, window_bounds = array<i64: 1, 8, 128>}, {transform_indices = @transform_9, window_bounds = array<i64: 1, 8, 128>}, {transform_indices = @transform_10, window_bounds = array<i64: 1, 8, 1>}, {transform_indices = @transform_11, window_bounds = array<i64: 1, 1, 8>}]} {
    %c0 = arith.constant 0 : index
    %c0_0 = arith.constant 0 : index
    %c0_1 = arith.constant 0 : index
    %0 = vector.load %arg1[%c0, %c0_0, %c0_1] : memref<1x8x128xf32, #tpu.memory_space<vmem>>, vector<1x8x128xf32>
    %1 = vector.shape_cast %0 : vector<1x8x128xf32> to vector<8x128xf32>
    %c0_2 = arith.constant 0 : index
    %c0_3 = arith.constant 0 : index
    %c0_4 = arith.constant 0 : index
    %2 = vector.load %arg2[%c0_2, %c0_3, %c0_4] : memref<1x8x128xf32, #tpu.memory_space<vmem>>, vector<1x8x128xf32>
    %3 = vector.shape_cast %2 : vector<1x8x128xf32> to vector<8x128xf32>
    %4 = arith.truncf %1 : vector<8x128xf32> to vector<8x128xbf16>
    %5 = arith.truncf %3 : vector<8x128xf32> to vector<8x128xbf16>
    %cst = arith.constant dense<0.000000e+00> : vector<8x8xf32>
    %6 = tpu.matmul %4, %5, %cst {dimension_numbers = #tpu.dot_dimension_numbers<[1], [1], [0], [0], [0, 0, 1, 0], [], []>} : vector<8x128xbf16>, vector<8x128xbf16>, vector<8x8xf32> -> vector<8x8xf32>
    %c0_5 = arith.constant 0 : index
    %c0_6 = arith.constant 0 : index
    %c0_7 = arith.constant 0 : index
    %7 = vector.load %arg3[%c0_5, %c0_6, %c0_7] : memref<1x8x1xf32, #tpu.memory_space<vmem>>, vector<1x8x1xf32>
    %8 = vector.shape_cast %7 : vector<1x8x1xf32> to vector<8x1xf32>
    %9 = vector.broadcast %8 : vector<8x1xf32> to vector<8x8xf32>
    %10 = arith.addf %6, %9 : vector<8x8xf32>
    %c0_8 = arith.constant 0 : index
    %c0_9 = arith.constant 0 : index
    %c0_10 = arith.constant 0 : index
    %11 = vector.load %arg4[%c0_8, %c0_9, %c0_10] : memref<1x1x8xf32, #tpu.memory_space<vmem>>, vector<1x1x8xf32>
    %12 = vector.shape_cast %11 : vector<1x1x8xf32> to vector<1x8xf32>
    %13 = vector.broadcast %12 : vector<1x8xf32> to vector<8x8xf32>
    %14 = arith.addf %10, %13 : vector<8x8xf32>
    %cst_11 = arith.constant dense<0xFF800000> : vector<8xf32>
    %15 = vector.multi_reduction <maximumf>, %14, %cst_11 [1] : vector<8x8xf32> to vector<8xf32>
    %16 = vector.shape_cast %15 : vector<8xf32> to vector<8x1xf32>
    %cst_12 = arith.constant dense<0xFF800000> : vector<8xf32>
    %17 = vector.multi_reduction <maximumf>, %14, %cst_12 [0] : vector<8x8xf32> to vector<8xf32>
    %18 = vector.shape_cast %17 : vector<8xf32> to vector<1x8xf32>
    %c0_13 = arith.constant 0 : index
    %c0_14 = arith.constant 0 : index
    %c0_15 = arith.constant 0 : index
    %19 = vector.load %arg11[%c0_13, %c0_14, %c0_15] : memref<1x8x1xf32, #tpu.memory_space<vmem>>, vector<1x8x1xf32>
    %20 = vector.shape_cast %19 : vector<1x8x1xf32> to vector<8x1xf32>
    %21 = vector.shape_cast %16 : vector<8x1xf32> to vector<1x8x1xf32>
    tpu.vector_store %arg11[%c0_13, %c0_14, %c0_15], %21 {strides = array<i32>} : memref<1x8x1xf32, #tpu.memory_space<vmem>>, vector<1x8x1xf32>,
    %c0_16 = arith.constant 0 : index
    %c0_17 = arith.constant 0 : index
    %c0_18 = arith.constant 0 : index
    %22 = vector.load %arg12[%c0_16, %c0_17, %c0_18] : memref<1x1x8xf32, #tpu.memory_space<vmem>>, vector<1x1x8xf32>
    %23 = vector.shape_cast %22 : vector<1x1x8xf32> to vector<1x8xf32>
    %24 = vector.shape_cast %18 : vector<1x8xf32> to vector<1x1x8xf32>
    tpu.vector_store %arg12[%c0_16, %c0_17, %c0_18], %24 {strides = array<i32>} : memref<1x1x8xf32, #tpu.memory_space<vmem>>, vector<1x1x8xf32>,
    %25 = vector.broadcast %16 : vector<8x1xf32> to vector<8x8xf32>
    %26 = arith.subf %14, %25 : vector<8x8xf32>
    %27 = math.exp %26 : vector<8x8xf32>
    %28 = vector.broadcast %18 : vector<1x8xf32> to vector<8x8xf32>
    %29 = arith.subf %14, %28 : vector<8x8xf32>
    %30 = math.exp %29 : vector<8x8xf32>
    %cst_19 = arith.constant dense<0.000000e+00> : vector<8xf32>
    %31 = vector.multi_reduction <add>, %27, %cst_19 [1] : vector<8x8xf32> to vector<8xf32>
    %32 = vector.shape_cast %31 : vector<8xf32> to vector<8x1xf32>
    %33 = tpu.reciprocal %32 {approx = true} : vector<8x1xf32> -> vector<8x1xf32>
    %34 = vector.broadcast %33 : vector<8x1xf32> to vector<8x8xf32>
    %35 = arith.mulf %27, %34 : vector<8x8xf32>
    %cst_20 = arith.constant dense<0.000000e+00> : vector<8xf32>
    %36 = vector.multi_reduction <add>, %30, %cst_20 [0] : vector<8x8xf32> to vector<8xf32>
    %37 = vector.shape_cast %36 : vector<8xf32> to vector<1x8xf32>
    %38 = tpu.reciprocal %37 {approx = true} : vector<1x8xf32> -> vector<1x8xf32>
    %39 = vector.broadcast %38 : vector<1x8xf32> to vector<8x8xf32>
    %40 = arith.mulf %30, %39 : vector<8x8xf32>
    %41 = arith.truncf %35 : vector<8x8xf32> to vector<8x8xbf16>
    %42 = arith.truncf %40 : vector<8x8xf32> to vector<8x8xbf16>
    %cst_21 = arith.constant dense<0.000000e+00> : vector<8x128xf32>
    %43 = tpu.matmul %41, %5, %cst_21 {dimension_numbers = #tpu.dot_dimension_numbers<[1], [0], [0], [1], [0, 0, 1, 1], [], []>} : vector<8x8xbf16>, vector<8x128xbf16>, vector<8x128xf32> -> vector<8x128xf32>
    %cst_22 = arith.constant dense<0.000000e+00> : vector<8x128xf32>
    %44 = tpu.matmul %42, %4, %cst_22 {dimension_numbers = #tpu.dot_dimension_numbers<[0], [0], [1], [1], [0, 1, 1, 1], [], []>} : vector<8x8xbf16>, vector<8x128xbf16>, vector<8x128xf32> -> vector<8x128xf32>
    %45 = arith.truncf %43 : vector<8x128xf32> to vector<8x128xbf16>
    %46 = arith.truncf %44 : vector<8x128xf32> to vector<8x128xbf16>
    %cst_23 = arith.constant dense<0.000000e+00> : vector<8x128xf32>
    %47 = tpu.matmul %41, %46, %cst_23 {dimension_numbers = #tpu.dot_dimension_numbers<[1], [0], [0], [1], [0, 0, 1, 1], [], []>} : vector<8x8xbf16>, vector<8x128xbf16>, vector<8x128xf32> -> vector<8x128xf32>
    %cst_24 = arith.constant dense<0.000000e+00> : vector<8x128xf32>
    %48 = tpu.matmul %42, %45, %cst_24 {dimension_numbers = #tpu.dot_dimension_numbers<[0], [0], [1], [1], [0, 1, 1, 1], [], []>} : vector<8x8xbf16>, vector<8x128xbf16>, vector<8x128xf32> -> vector<8x128xf32>
    %49 = arith.truncf %47 : vector<8x128xf32> to vector<8x128xbf16>
    %50 = tpu.concatenate %49, %45 in 1 : vector<8x128xbf16>, vector<8x128xbf16> -> vector<8x256xbf16>
    %51 = arith.truncf %48 : vector<8x128xf32> to vector<8x128xbf16>
    %52 = tpu.concatenate %51, %46 in 1 : vector<8x128xbf16>, vector<8x128xbf16> -> vector<8x256xbf16>
    %c0_25 = arith.constant 0 : index
    %c0_26 = arith.constant 0 : index
    %53 = vector.load %arg5[%c0_25, %c0_26] : memref<256x128xbf16, #tpu.memory_space<vmem>>, vector<256x128xbf16>
    %cst_27 = arith.constant dense<0.000000e+00> : vector<8x128xf32>
    %54 = tpu.matmul %50, %53, %cst_27 {dimension_numbers = #tpu.dot_dimension_numbers<[1], [0], [0], [1], [0, 0, 1, 1], [], []>} : vector<8x256xbf16>, vector<256x128xbf16>, vector<8x128xf32> -> vector<8x128xf32>
    %c0_28 = arith.constant 0 : index
    %c0_29 = arith.constant 0 : index
    %55 = vector.load %arg6[%c0_28, %c0_29] : memref<1x128xf32, #tpu.memory_space<vmem>>, vector<1x128xf32>
    %56 = vector.broadcast %55 : vector<1x128xf32> to vector<8x128xf32>
    %57 = arith.addf %54, %56 : vector<8x128xf32>
    %c0_30 = arith.constant 0 : index
    %c0_31 = arith.constant 0 : index
    %58 = vector.load %arg7[%c0_30, %c0_31] : memref<256x128xbf16, #tpu.memory_space<vmem>>, vector<256x128xbf16>
    %cst_32 = arith.constant dense<0.000000e+00> : vector<8x128xf32>
    %59 = tpu.matmul %52, %58, %cst_32 {dimension_numbers = #tpu.dot_dimension_numbers<[1], [0], [0], [1], [0, 0, 1, 1], [], []>} : vector<8x256xbf16>, vector<256x128xbf16>, vector<8x128xf32> -> vector<8x128xf32>
    %c0_33 = arith.constant 0 : index
    %c0_34 = arith.constant 0 : index
    %60 = vector.load %arg8[%c0_33, %c0_34] : memref<1x128xf32, #tpu.memory_space<vmem>>, vector<1x128xf32>
    %61 = vector.broadcast %60 : vector<1x128xf32> to vector<8x128xf32>
    %62 = arith.addf %59, %61 : vector<8x128xf32>
    %63 = arith.addf %1, %57 : vector<8x128xf32>
    %64 = arith.addf %3, %62 : vector<8x128xf32>
    %65 = vector.shape_cast %63 : vector<8x128xf32> to vector<1x8x128xf32>
    %cst_35 = arith.constant dense<0.000000e+00> : vector<1xf32>
    %66 = vector.multi_reduction <add>, %65, %cst_35 [1, 2] : vector<1x8x128xf32> to vector<1xf32>
    %67 = vector.shape_cast %66 : vector<1xf32> to vector<1x1x1xf32>
    %68 = vector.extract %67[0, 0, 0] : f32 from vector<1x1x1xf32>
    %cst_36 = arith.constant 3.906250e-03 : f32
    %69 = arith.mulf %68, %cst_36 : f32
    %70 = arith.mulf %63, %63 : vector<8x128xf32>
    %71 = vector.shape_cast %70 : vector<8x128xf32> to vector<1x8x128xf32>
    %cst_37 = arith.constant dense<0.000000e+00> : vector<1xf32>
    %72 = vector.multi_reduction <add>, %71, %cst_37 [1, 2] : vector<1x8x128xf32> to vector<1xf32>
    %73 = vector.shape_cast %72 : vector<1xf32> to vector<1x1x1xf32>
    %74 = vector.extract %73[0, 0, 0] : f32 from vector<1x1x1xf32>
    %cst_38 = arith.constant 3.906250e-03 : f32
    %75 = arith.mulf %74, %cst_38 : f32
    %76 = arith.mulf %69, %69 : f32
    %77 = arith.subf %75, %76 : f32
    %78 = vector.broadcast %69 : f32 to vector<8x128xf32>
    %79 = arith.subf %63, %78 : vector<8x128xf32>
    %cst_39 = arith.constant 9.99999974E-6 : f32
    %80 = arith.addf %77, %cst_39 : f32
    %81 = math.rsqrt %80 : f32
    %82 = vector.broadcast %81 : f32 to vector<8x128xf32>
    %83 = arith.mulf %79, %82 : vector<8x128xf32>
    %c0_40 = arith.constant 0 : index
    %c0_41 = arith.constant 0 : index
    %c0_42 = arith.constant 0 : index
    %84 = vector.load %arg9[%c0_40, %c0_41, %c0_42] : memref<1x8x128xf32, #tpu.memory_space<vmem>>, vector<1x8x128xf32>
    %85 = vector.shape_cast %84 : vector<1x8x128xf32> to vector<8x128xf32>
    %86 = vector.shape_cast %83 : vector<8x128xf32> to vector<1x8x128xf32>
    tpu.vector_store %arg9[%c0_40, %c0_41, %c0_42], %86 {strides = array<i32>} : memref<1x8x128xf32, #tpu.memory_space<vmem>>, vector<1x8x128xf32>,
    %87 = vector.shape_cast %64 : vector<8x128xf32> to vector<1x8x128xf32>
    %cst_43 = arith.constant dense<0.000000e+00> : vector<1xf32>
    %88 = vector.multi_reduction <add>, %87, %cst_43 [1, 2] : vector<1x8x128xf32> to vector<1xf32>
    %89 = vector.shape_cast %88 : vector<1xf32> to vector<1x1x1xf32>
    %90 = vector.extract %89[0, 0, 0] : f32 from vector<1x1x1xf32>
    %cst_44 = arith.constant 3.906250e-03 : f32
    %91 = arith.mulf %90, %cst_44 : f32
    %92 = arith.mulf %64, %64 : vector<8x128xf32>
    %93 = vector.shape_cast %92 : vector<8x128xf32> to vector<1x8x128xf32>
    %cst_45 = arith.constant dense<0.000000e+00> : vector<1xf32>
    %94 = vector.multi_reduction <add>, %93, %cst_45 [1, 2] : vector<1x8x128xf32> to vector<1xf32>
    %95 = vector.shape_cast %94 : vector<1xf32> to vector<1x1x1xf32>
    %96 = vector.extract %95[0, 0, 0] : f32 from vector<1x1x1xf32>
    %cst_46 = arith.constant 3.906250e-03 : f32
    %97 = arith.mulf %96, %cst_46 : f32
    %98 = arith.mulf %91, %91 : f32
    %99 = arith.subf %97, %98 : f32
    %100 = vector.broadcast %91 : f32 to vector<8x128xf32>
    %101 = arith.subf %64, %100 : vector<8x128xf32>
    %cst_47 = arith.constant 9.99999974E-6 : f32
    %102 = arith.addf %99, %cst_47 : f32
    %103 = math.rsqrt %102 : f32
    %104 = vector.broadcast %103 : f32 to vector<8x128xf32>
    %105 = arith.mulf %101, %104 : vector<8x128xf32>
    %c0_48 = arith.constant 0 : index
    %c0_49 = arith.constant 0 : index
    %c0_50 = arith.constant 0 : index
    %106 = vector.load %arg10[%c0_48, %c0_49, %c0_50] : memref<1x8x128xf32, #tpu.memory_space<vmem>>, vector<1x8x128xf32>
    %107 = vector.shape_cast %106 : vector<1x8x128xf32> to vector<8x128xf32>
    %108 = vector.shape_cast %105 : vector<8x128xf32> to vector<1x8x128xf32>
    tpu.vector_store %arg10[%c0_48, %c0_49, %c0_50], %108 {strides = array<i32>} : memref<1x8x128xf32, #tpu.memory_space<vmem>>, vector<1x8x128xf32>,
    return
  }
  func.func @transform_0(%arg0: i32) -> (i32, i32, i32) {
    %c0_i32 = arith.constant 0 : i32
    %c0_i32_0 = arith.constant 0 : i32
    %c0_i32_1 = arith.constant 0 : i32
    return %arg0, %c0_i32, %c0_i32_0 : i32, i32, i32
  }
  func.func @transform_1(%arg0: i32) -> (i32, i32, i32) {
    %c0_i32 = arith.constant 0 : i32
    %c0_i32_0 = arith.constant 0 : i32
    %c0_i32_1 = arith.constant 0 : i32
    return %arg0, %c0_i32, %c0_i32_0 : i32, i32, i32
  }
  func.func @transform_2(%arg0: i32) -> (i32, i32, i32) {
    %c0_i32 = arith.constant 0 : i32
    %c0_i32_0 = arith.constant 0 : i32
    %c0_i32_1 = arith.constant 0 : i32
    return %arg0, %c0_i32, %c0_i32_0 : i32, i32, i32
  }
  func.func @transform_3(%arg0: i32) -> (i32, i32, i32) {
    %c0_i32 = arith.constant 0 : i32
    %c0_i32_0 = arith.constant 0 : i32
    %c0_i32_1 = arith.constant 0 : i32
    return %arg0, %c0_i32, %c0_i32_0 : i32, i32, i32
  }
  func.func @transform_4(%arg0: i32) -> (i32, i32) {
    %c0_i32 = arith.constant 0 : i32
    %c0_i32_0 = arith.constant 0 : i32
    %c0_i32_1 = arith.constant 0 : i32
    return %c0_i32, %c0_i32_0 : i32, i32
  }
  func.func @transform_5(%arg0: i32) -> (i32, i32) {
    %c0_i32 = arith.constant 0 : i32
    %c0_i32_0 = arith.constant 0 : i32
    %c0_i32_1 = arith.constant 0 : i32
    return %c0_i32, %c0_i32_0 : i32, i32
  }
  func.func @transform_6(%arg0: i32) -> (i32, i32) {
    %c0_i32 = arith.constant 0 : i32
    %c0_i32_0 = arith.constant 0 : i32
    %c0_i32_1 = arith.constant 0 : i32
    return %c0_i32, %c0_i32_0 : i32, i32
  }
  func.func @transform_7(%arg0: i32) -> (i32, i32) {
    %c0_i32 = arith.constant 0 : i32
    %c0_i32_0 = arith.constant 0 : i32
    %c0_i32_1 = arith.constant 0 : i32
    return %c0_i32, %c0_i32_0 : i32, i32
  }
  func.func @transform_8(%arg0: i32) -> (i32, i32, i32) {
    %c0_i32 = arith.constant 0 : i32
    %c0_i32_0 = arith.constant 0 : i32
    %c0_i32_1 = arith.constant 0 : i32
    return %arg0, %c0_i32, %c0_i32_0 : i32, i32, i32
  }
  func.func @transform_9(%arg0: i32) -> (i32, i32, i32) {
    %c0_i32 = arith.constant 0 : i32
    %c0_i32_0 = arith.constant 0 : i32
    %c0_i32_1 = arith.constant 0 : i32
    return %arg0, %c0_i32, %c0_i32_0 : i32, i32, i32
  }
  func.func @transform_10(%arg0: i32) -> (i32, i32, i32) {
    %c0_i32 = arith.constant 0 : i32
    %c0_i32_0 = arith.constant 0 : i32
    %c0_i32_1 = arith.constant 0 : i32
    return %arg0, %c0_i32, %c0_i32_0 : i32, i32, i32
  }
  func.func @transform_11(%arg0: i32) -> (i32, i32, i32) {
    %c0_i32 = arith.constant 0 : i32
    %c0_i32_0 = arith.constant 0 : i32
    %c0_i32_1 = arith.constant 0 : i32
    return %arg0, %c0_i32, %c0_i32_0 : i32, i32, i32
  }
}

</mosaic_0001>

<llo_original>
// kernel: dpda_layer.1
$region0: #{dpda_layer.1}
  #allocation0 [shape = 'u32[]', space=smem, size = 0x4, offset = 0x4, fixed_abs, tag = 'smem constant byte address 0x4 - core index']
  #allocation1 [shape = 'u32[144,128]{1,0:T(1,128)}', space=vmem, size = 0x12000, scoped, tag = 'internal scratch']
  %s0 = inlined_call_operand.vmem [shape: f32[2,8,128], index: 0, kind: input, shape index: {}]
  %s1 = inlined_call_operand.vmem [shape: f32[2,8,128], index: 1, kind: input, shape index: {}]
  %s2 = inlined_call_operand.vmem [shape: f32[2,8,1], index: 2, kind: input, shape index: {}]
  %s3 = inlined_call_operand.vmem [shape: f32[2,1,8], index: 3, kind: input, shape index: {}]
  %s4 = inlined_call_operand.vmem [shape: bf16[256,128], index: 4, kind: input, shape index: {}]
  %s5 = inlined_call_operand.vmem [shape: f32[1,128], index: 5, kind: input, shape index: {}]
  %s6 = inlined_call_operand.vmem [shape: bf16[256,128], index: 6, kind: input, shape index: {}]
  %s7 = inlined_call_operand.vmem [shape: f32[1,128], index: 7, kind: input, shape index: {}]
  %s8 = inlined_call_operand.hbm [shape: f32[2,8,128], index: 8, kind: output, shape index: {0}]
  %s9 = inlined_call_operand.hbm [shape: f32[2,8,128], index: 9, kind: output, shape index: {1}]
  %s10 = inlined_call_operand.vmem [shape: f32[2,8,1], index: 10, kind: output, shape index: {2}]
  %s11 = inlined_call_operand.hbm [shape: f32[2,1,8], index: 11, kind: output, shape index: {3}]
  %12 = xla_tuple %s8, %s9, %s10, %s11
  %s13 = sld [smem:[#allocation0]]
  $region89: #{dpda_layer.1} parent=0
    _
  %s15 = ssub.s32 1, %s13
  %s16 = scalar_select 0, %s15, %s13
  $region1: #{dpda_layer.1} parent=0
    #allocation2 [shape = 'u8[8192]{0}', space=vmem, size = 0x2000, scoped, tag = 'output window, operand 0']
    #allocation3 [shape = 's32[2]{0}', space=sflag, size = 0x8, scoped, tag = 'scoped memory for dpda_layer.1']
    #allocation4 [shape = 'u8[8192]{0}', space=vmem, size = 0x2000, scoped, tag = 'output window, operand 1']
    #allocation5 [shape = 's32[2]{0}', space=sflag, size = 0x8, scoped, tag = 'scoped memory for dpda_layer.1']
    #allocation6 [shape = 'u8[1024]{0}', space=vmem, size = 0x400, scoped, tag = 'output window, operand 3']
    %17 = vsyncpa [#allocation3], 0
    %s18 = scalar_lea.sflag [#allocation3], 1
    %19 = vsyncpa %s18, 0
    %20 = vsyncpa [#allocation5], 0
    %s21 = scalar_lea.sflag [#allocation5], 1
    %22 = vsyncpa %s21, 0
    loop: start=0, step=1, limit=4
    $region2: #{dpda_layer.1} parent=1 // loop_pre_header
      _
    $region3: #{dpda_layer.1} parent=1 // loop_header
      %s24 = sphi 0, %s28
      %p25 = scmp.ge.s32.totalorder %s24, 4
      %s34 = sphi 0, %s36
      %s37 = sphi 0, %s34
      %s38 = sphi 0, %s37
      %s54 = sphi 0, %s38
      %s60 = sphi 0, %s62
      %s63 = sphi 0, %s60
      %s64 = sphi 0, %s63
      %s80 = sphi 0, %s64
      %s86 = sphi 0, %s88
      %s89 = sphi 0, %s86
      %s90 = sphi 0, %s89
      %s106 = sphi 0, %s90
      %s112 = sphi 0, %s114
      %s115 = sphi 0, %s112
      %s116 = sphi 0, %s115
      %s132 = sphi 0, %s116
      %s136 = sphi 0, %s136
      %s138 = sphi 0, %s136
      %s139 = sphi 0, %s138
      %s153 = sphi 0, %s139
      %s157 = sphi 0, %s157
      %s159 = sphi 0, %s157
      %s160 = sphi 0, %s159
      %s174 = sphi 0, %s160
      %s178 = sphi 0, %s178
      %s180 = sphi 0, %s178
      %s181 = sphi 0, %s180
      %s195 = sphi 0, %s181
      %s199 = sphi 0, %s199
      %s201 = sphi 0, %s199
      %s202 = sphi 0, %s201
      %s216 = sphi 0, %s202
      %s222 = sphi 0, %s224
      %s225 = sphi 0, %s222
      %s226 = sphi 0, %s225
      %s242 = sphi 0, %s226
      %s248 = sphi 0, %s250
      %s251 = sphi 0, %s248
      %s252 = sphi 0, %s251
      %s268 = sphi 0, %s252
      %s274 = sphi 0, %s276
      %s277 = sphi 0, %s274
      %s278 = sphi 0, %s277
      %s294 = sphi 0, %s278
      %s300 = sphi 0, %s302
      %s303 = sphi 0, %s300
      %s304 = sphi 0, %s303
      %s320 = sphi 0, %s304
    $region4: #{dpda_layer.1} parent=1 // loop_header_branch
      %27 = sbr.rel (%p25) target = $region8
    $region5: #{dpda_layer.1} parent=1 // loop_body
      %s29 = ssub.s32 %s24, 1
      %s30 = ssub.s32 %s24, 2
      %s31 = sadd.s32 %s24, 1
      %s32 = ssub.s32 %s24, %s31
      %p33 = scmp.eq.s32.totalorder %s32, 0
      %s35 = sadd.s32 %s34, 1
      %s36 = scalar_select %p33, %s34, %s35
      %p39 = pneg %p33
      %p40 = scmp.eq.s32.totalorder %s24, 1
      %p41 = por %p39, %p40
      %p42 = scmp.ne.s32.totalorder %s34, %s37
      %p43 = scmp.eq.s32.totalorder %s24, 0
      %p44 = por %p42, %p43
      %p45 = scmp.ne.s32.totalorder %s34, %s37
      %p46 = scmp.eq.s32.totalorder %s29, 1
      %p47 = por %p45, %p46
      %p48 = scmp.ne.s32.totalorder %s37, %s38
      %p49 = scmp.eq.s32.totalorder %s29, 0
      %p50 = por %p48, %p49
      %p51 = scmp.ne.s32.totalorder %s37, %s38
      %p52 = scmp.eq.s32.totalorder %s30, 1
      %p53 = por %p51, %p52
      %p55 = scmp.ne.s32.totalorder %s38, %s54
      %p56 = scmp.eq.s32.totalorder %s30, 0
      %p57 = por %p55, %p56
      %s58 = ssub.s32 %s24, %s31
      %p59 = scmp.eq.s32.totalorder %s58, 0
      %s61 = sadd.s32 %s60, 1
      %s62 = scalar_select %p59, %s60, %s61
      %p65 = pneg %p59
      %p66 = scmp.eq.s32.totalorder %s24, 1
      %p67 = por %p65, %p66
      %p68 = scmp.ne.s32.totalorder %s60, %s63
      %p69 = scmp.eq.s32.totalorder %s24, 0
      %p70 = por %p68, %p69
      %p71 = scmp.ne.s32.totalorder %s60, %s63
      %p72 = scmp.eq.s32.totalorder %s29, 1
      %p73 = por %p71, %p72
      %p74 = scmp.ne.s32.totalorder %s63, %s64
      %p75 = scmp.eq.s32.totalorder %s29, 0
      %p76 = por %p74, %p75
      %p77 = scmp.ne.s32.totalorder %s63, %s64
      %p78 = scmp.eq.s32.totalorder %s30, 1
      %p79 = por %p77, %p78
      %p81 = scmp.ne.s32.totalorder %s64, %s80
      %p82 = scmp.eq.s32.totalorder %s30, 0
      %p83 = por %p81, %p82
      %s84 = ssub.s32 %s24, %s31
      %p85 = scmp.eq.s32.totalorder %s84, 0
      %s87 = sadd.s32 %s86, 1
      %s88 = scalar_select %p85, %s86, %s87
      %p91 = pneg %p85
      %p92 = scmp.eq.s32.totalorder %s24, 1
      %p93 = por %p91, %p92
      %p94 = scmp.ne.s32.totalorder %s86, %s89
      %p95 = scmp.eq.s32.totalorder %s24, 0
      %p96 = por %p94, %p95
      %p97 = scmp.ne.s32.totalorder %s86, %s89
      %p98 = scmp.eq.s32.totalorder %s29, 1
      %p99 = por %p97, %p98
      %p100 = scmp.ne.s32.totalorder %s89, %s90
      %p101 = scmp.eq.s32.totalorder %s29, 0
      %p102 = por %p100, %p101
      %p103 = scmp.ne.s32.totalorder %s89, %s90
      %p104 = scmp.eq.s32.totalorder %s30, 1
      %p105 = por %p103, %p104
      %p107 = scmp.ne.s32.totalorder %s90, %s106
      %p108 = scmp.eq.s32.totalorder %s30, 0
      %p109 = por %p107, %p108
      %s110 = ssub.s32 %s24, %s31
      %p111 = scmp.eq.s32.totalorder %s110, 0
      %s113 = sadd.s32 %s112, 1
      %s114 = scalar_select %p111, %s112, %s113
      %p117 = pneg %p111
      %p118 = scmp.eq.s32.totalorder %s24, 1
      %p119 = por %p117, %p118
      %p120 = scmp.ne.s32.totalorder %s112, %s115
      %p121 = scmp.eq.s32.totalorder %s24, 0
      %p122 = por %p120, %p121
      %p123 = scmp.ne.s32.totalorder %s112, %s115
      %p124 = scmp.eq.s32.totalorder %s29, 1
      %p125 = por %p123, %p124
      %p126 = scmp.ne.s32.totalorder %s115, %s116
      %p127 = scmp.eq.s32.totalorder %s29, 0
      %p128 = por %p126, %p127
      %p129 = scmp.ne.s32.totalorder %s115, %s116
      %p130 = scmp.eq.s32.totalorder %s30, 1
      %p131 = por %p129, %p130
      %p133 = scmp.ne.s32.totalorder %s116, %s132
      %p134 = scmp.eq.s32.totalorder %s30, 0
      %p135 = por %p133, %p134
      %s137 = sadd.s32 %s136, 1
      %p140 = scmp.eq.s32.totalorder %s24, 1
      %p141 = scmp.ne.s32.totalorder %s136, %s138
      %p142 = scmp.eq.s32.totalorder %s24, 0
      %p143 = por %p141, %p142
      %p144 = scmp.ne.s32.totalorder %s136, %s138
      %p145 = scmp.eq.s32.totalorder %s29, 1
      %p146 = por %p144, %p145
      %p147 = scmp.ne.s32.totalorder %s138, %s139
      %p148 = scmp.eq.s32.totalorder %s29, 0
      %p149 = por %p147, %p148
      %p150 = scmp.ne.s32.totalorder %s138, %s139
      %p151 = scmp.eq.s32.totalorder %s30, 1
      %p152 = por %p150, %p151
      %p154 = scmp.ne.s32.totalorder %s139, %s153
      %p155 = scmp.eq.s32.totalorder %s30, 0
      %p156 = por %p154, %p155
      %s158 = sadd.s32 %s157, 1
      %p161 = scmp.eq.s32.totalorder %s24, 1
      %p162 = scmp.ne.s32.totalorder %s157, %s159
      %p163 = scmp.eq.s32.totalorder %s24, 0
      %p164 = por %p162, %p163
      %p165 = scmp.ne.s32.totalorder %s157, %s159
      %p166 = scmp.eq.s32.totalorder %s29, 1
      %p167 = por %p165, %p166
      %p168 = scmp.ne.s32.totalorder %s159, %s160
      %p169 = scmp.eq.s32.totalorder %s29, 0
      %p170 = por %p168, %p169
      %p171 = scmp.ne.s32.totalorder %s159, %s160
      %p172 = scmp.eq.s32.totalorder %s30, 1
      %p173 = por %p171, %p172
      %p175 = scmp.ne.s32.totalorder %s160, %s174
      %p176 = scmp.eq.s32.totalorder %s30, 0
      %p177 = por %p175, %p176
      %s179 = sadd.s32 %s178, 1
      %p182 = scmp.eq.s32.totalorder %s24, 1
      %p183 = scmp.ne.s32.totalorder %s178, %s180
      %p184 = scmp.eq.s32.totalorder %s24, 0
      %p185 = por %p183, %p184
      %p186 = scmp.ne.s32.totalorder %s178, %s180
      %p187 = scmp.eq.s32.totalorder %s29, 1
      %p188 = por %p186, %p187
      %p189 = scmp.ne.s32.totalorder %s180, %s181
      %p190 = scmp.eq.s32.totalorder %s29, 0
      %p191 = por %p189, %p190
      %p192 = scmp.ne.s32.totalorder %s180, %s181
      %p193 = scmp.eq.s32.totalorder %s30, 1
      %p194 = por %p192, %p193
      %p196 = scmp.ne.s32.totalorder %s181, %s195
      %p197 = scmp.eq.s32.totalorder %s30, 0
      %p198 = por %p196, %p197
      %s200 = sadd.s32 %s199, 1
      %p203 = scmp.eq.s32.totalorder %s24, 1
      %p204 = scmp.ne.s32.totalorder %s199, %s201
      %p205 = scmp.eq.s32.totalorder %s24, 0
      %p206 = por %p204, %p205
      %p207 = scmp.ne.s32.totalorder %s199, %s201
      %p208 = scmp.eq.s32.totalorder %s29, 1
      %p209 = por %p207, %p208
      %p210 = scmp.ne.s32.totalorder %s201, %s202
      %p211 = scmp.eq.s32.totalorder %s29, 0
      %p212 = por %p210, %p211
      %p213 = scmp.ne.s32.totalorder %s201, %s202
      %p214 = scmp.eq.s32.totalorder %s30, 1
      %p215 = por %p213, %p214
      %p217 = scmp.ne.s32.totalorder %s202, %s216
      %p218 = scmp.eq.s32.totalorder %s30, 0
      %p219 = por %p217, %p218
      %s220 = ssub.s32 %s24, %s31
      %p221 = scmp.eq.s32.totalorder %s220, 0
      %s223 = sadd.s32 %s222, 1
      %s224 = scalar_select %p221, %s222, %s223
      %p227 = pneg %p221
      %p228 = scmp.eq.s32.totalorder %s24, 1
      %p229 = por %p227, %p228
      %p230 = scmp.ne.s32.totalorder %s222, %s225
      %p231 = scmp.eq.s32.totalorder %s24, 0
      %p232 = por %p230, %p231
      %p233 = scmp.ne.s32.totalorder %s222, %s225
      %p234 = scmp.eq.s32.totalorder %s29, 1
      %p235 = por %p233, %p234
      %p236 = scmp.ne.s32.totalorder %s225, %s226
      %p237 = scmp.eq.s32.totalorder %s29, 0
      %p238 = por %p236, %p237
      %p239 = scmp.ne.s32.totalorder %s225, %s226
      %p240 = scmp.eq.s32.totalorder %s30, 1
      %p241 = por %p239, %p240
      %p243 = scmp.ne.s32.totalorder %s226, %s242
      %p244 = scmp.eq.s32.totalorder %s30, 0
      %p245 = por %p243, %p244
      %s246 = ssub.s32 %s24, %s31
      %p247 = scmp.eq.s32.totalorder %s246, 0
      %s249 = sadd.s32 %s248, 1
      %s250 = scalar_select %p247, %s248, %s249
      %p253 = pneg %p247
      %p254 = scmp.eq.s32.totalorder %s24, 1
      %p255 = por %p253, %p254
      %p256 = scmp.ne.s32.totalorder %s248, %s251
      %p257 = scmp.eq.s32.totalorder %s24, 0
      %p258 = por %p256, %p257
      %p259 = scmp.ne.s32.totalorder %s248, %s251
      %p260 = scmp.eq.s32.totalorder %s29, 1
      %p261 = por %p259, %p260
      %p262 = scmp.ne.s32.totalorder %s251, %s252
      %p263 = scmp.eq.s32.totalorder %s29, 0
      %p264 = por %p262, %p263
      %p265 = scmp.ne.s32.totalorder %s251, %s252
      %p266 = scmp.eq.s32.totalorder %s30, 1
      %p267 = por %p265, %p266
      %p269 = scmp.ne.s32.totalorder %s252, %s268
      %p270 = scmp.eq.s32.totalorder %s30, 0
      %p271 = por %p269, %p270
      %s272 = ssub.s32 %s24, %s31
      %p273 = scmp.eq.s32.totalorder %s272, 0
      %s275 = sadd.s32 %s274, 1
      %s276 = scalar_select %p273, %s274, %s275
      %p279 = pneg %p273
      %p280 = scmp.eq.s32.totalorder %s24, 1
      %p281 = por %p279, %p280
      %p282 = scmp.ne.s32.totalorder %s274, %s277
      %p283 = scmp.eq.s32.totalorder %s24, 0
      %p284 = por %p282, %p283
      %p285 = scmp.ne.s32.totalorder %s274, %s277
      %p286 = scmp.eq.s32.totalorder %s29, 1
      %p287 = por %p285, %p286
      %p288 = scmp.ne.s32.totalorder %s277, %s278
      %p289 = scmp.eq.s32.totalorder %s29, 0
      %p290 = por %p288, %p289
      %p291 = scmp.ne.s32.totalorder %s277, %s278
      %p292 = scmp.eq.s32.totalorder %s30, 1
      %p293 = por %p291, %p292
      %p295 = scmp.ne.s32.totalorder %s278, %s294
      %p296 = scmp.eq.s32.totalorder %s30, 0
      %p297 = por %p295, %p296
      %s298 = ssub.s32 %s24, %s31
      %p299 = scmp.eq.s32.totalorder %s298, 0
      %s301 = sadd.s32 %s300, 1
      %s302 = scalar_select %p299, %s300, %s301
      %p305 = pneg %p299
      %p306 = scmp.eq.s32.totalorder %s24, 1
      %p307 = por %p305, %p306
      %p308 = scmp.ne.s32.totalorder %s300, %s303
      %p309 = scmp.eq.s32.totalorder %s24, 0
      %p310 = por %p308, %p309
      %p311 = scmp.ne.s32.totalorder %s300, %s303
      %p312 = scmp.eq.s32.totalorder %s29, 1
      %p313 = por %p311, %p312
      %p314 = scmp.ne.s32.totalorder %s303, %s304
      %p315 = scmp.eq.s32.totalorder %s29, 0
      %p316 = por %p314, %p315
      %p317 = scmp.ne.s32.totalorder %s303, %s304
      %p318 = scmp.eq.s32.totalorder %s30, 1
      %p319 = por %p317, %p318
      %p321 = scmp.ne.s32.totalorder %s304, %s320
      %p322 = scmp.eq.s32.totalorder %s30, 0
      %p323 = por %p321, %p322
      %p324 = scmp.le.s32.totalorder 1, %s24
      %p325 = scmp.lt.s32.totalorder %s24, 3
      %p326 = pnand %p324, %p325
      %p327 = pneg %p326
      // Predicated region
      $region9: #{dpda_layer.1} parent=5 // pred_check
        _
      $region10: #{dpda_layer.1} parent=5 // pred_check_branch
        %329 = sbr.rel (%p326) target = $region12
      $region11: #{dpda_layer.1} parent=5 // pred_region
        %s330 = ssub.s32 %s24, 1
        // Predicated region
        $region13: #{dpda_layer.1} parent=11 // pred_check
          %p331 = pneg %p149
        $region14: #{dpda_layer.1} parent=11 // pred_check_branch
          %333 = sbr.rel (%p331) target = $region16
        $region15: #{dpda_layer.1} parent=11 // pred_region
          _
        $region16: #{dpda_layer.1} parent=11 // pred_fallthru
          _
        // Predicated region
        $region17: #{dpda_layer.1} parent=11 // pred_check
          %p334 = pneg %p170
        $region18: #{dpda_layer.1} parent=11 // pred_check_branch
          %336 = sbr.rel (%p334) target = $region20
        $region19: #{dpda_layer.1} parent=11 // pred_region
          _
        $region20: #{dpda_layer.1} parent=11 // pred_fallthru
          _
        // Predicated region
        $region21: #{dpda_layer.1} parent=11 // pred_check
          %p337 = pneg %p191
        $region22: #{dpda_layer.1} parent=11 // pred_check_branch
          %339 = sbr.rel (%p337) target = $region24
        $region23: #{dpda_layer.1} parent=11 // pred_region
          _
        $region24: #{dpda_layer.1} parent=11 // pred_fallthru
          _
        // Predicated region
        $region25: #{dpda_layer.1} parent=11 // pred_check
          %p340 = pneg %p212
        $region26: #{dpda_layer.1} parent=11 // pred_check_branch
          %342 = sbr.rel (%p340) target = $region28
        $region27: #{dpda_layer.1} parent=11 // pred_region
          _
        $region28: #{dpda_layer.1} parent=11 // pred_fallthru
          _
      $region12: #{dpda_layer.1} parent=5 // pred_fallthru
        _
      %p343 = scmp.lt.s32.totalorder %s24, 2
      // Predicated region
      $region29: #{dpda_layer.1} parent=5 // pred_check
        %p344 = pneg %p343
      $region30: #{dpda_layer.1} parent=5 // pred_check_branch
        %346 = sbr.rel (%p344) target = $region32
      $region31: #{dpda_layer.1} parent=5 // pred_region
        // Predicated region
        $region33: #{dpda_layer.1} parent=31 // pred_check
          %p347 = pneg %p44
        $region34: #{dpda_layer.1} parent=31 // pred_check_branch
          %349 = sbr.rel (%p347) target = $region36
        $region35: #{dpda_layer.1} parent=31 // pred_region
          %p350 = scmp.lt.s32.totalorder %s24, 1
          %s351 = scalar_select %p350, %s24, 1
          %s352 = smul.addr %s351, 8
          %s353 = scalar_lea.vmem %s0, %s352
        $region36: #{dpda_layer.1} parent=31 // pred_fallthru
          _
        // Predicated region
        $region37: #{dpda_layer.1} parent=31 // pred_check
          %p354 = pneg %p70
        $region38: #{dpda_layer.1} parent=31 // pred_check_branch
          %356 = sbr.rel (%p354) target = $region40
        $region39: #{dpda_layer.1} parent=31 // pred_region
          %p357 = scmp.lt.s32.totalorder %s24, 1
          %s358 = scalar_select %p357, %s24, 1
          %s359 = smul.addr %s358, 8
          %s360 = scalar_lea.vmem %s1, %s359
        $region40: #{dpda_layer.1} parent=31 // pred_fallthru
          _
        // Predicated region
        $region41: #{dpda_layer.1} parent=31 // pred_check
          %p361 = pneg %p96
        $region42: #{dpda_layer.1} parent=31 // pred_check_branch
          %363 = sbr.rel (%p361) target = $region44
        $region43: #{dpda_layer.1} parent=31 // pred_region
          %p364 = scmp.lt.s32.totalorder %s24, 1
          %s365 = scalar_select %p364, %s24, 1
          %s366 = smul.addr %s365, 8
          %s367 = scalar_lea.vmem %s2, %s366
        $region44: #{dpda_layer.1} parent=31 // pred_fallthru
          _
        // Predicated region
        $region45: #{dpda_layer.1} parent=31 // pred_check
          %p368 = pneg %p122
        $region46: #{dpda_layer.1} parent=31 // pred_check_branch
          %370 = sbr.rel (%p368) target = $region48
        $region47: #{dpda_layer.1} parent=31 // pred_region
          %p371 = scmp.lt.s32.totalorder %s24, 1
          %s372 = scalar_select %p371, %s24, 1
          %s373 = scalar_lea.vmem %s3, %s372
        $region48: #{dpda_layer.1} parent=31 // pred_fallthru
          _
      $region32: #{dpda_layer.1} parent=5 // pred_fallthru
        _
      %p374 = scmp.le.s32.totalorder 1, %s24
      %p375 = scmp.lt.s32.totalorder %s24, 3
      %p376 = pnand %p374, %p375
      %p377 = pneg %p376
      // Predicated region
      $region49: #{dpda_layer.1} parent=5 // pred_check
        _
      $region50: #{dpda_layer.1} parent=5 // pred_check_branch
        %379 = sbr.rel (%p376) target = $region52
      $region51: #{dpda_layer.1} parent=5 // pred_region
        %s380 = ssub.s32 %s24, 1
        %p381 = scmp.lt.s32.totalorder %s29, 1
        %s382 = scalar_select %p381, %s29, 1
        %s383 = smul.addr %s382, 8
        %s384 = scalar_lea.vmem %s0, %s383
        %p385 = pneg %p50
        %p386 = pneg %p47
        %p387 = scmp.lt.s32.totalorder %s29, 1
        %s388 = scalar_select %p387, %s29, 1
        %s389 = smul.addr %s388, 8
        %s390 = scalar_lea.vmem %s1, %s389
        %p391 = pneg %p76
        %p392 = pneg %p73
        %p393 = scmp.lt.s32.totalorder %s29, 1
        %s394 = scalar_select %p393, %s29, 1
        %s395 = smul.addr %s394, 8
        %s396 = scalar_lea.vmem %s2, %s395
        %p397 = pneg %p102
        %p398 = pneg %p99
        %p399 = scmp.lt.s32.totalorder %s29, 1
        %s400 = scalar_select %p399, %s29, 1
        %s401 = scalar_lea.vmem %s3, %s400
        %p402 = pneg %p128
        %p403 = pneg %p125
        %p404 = pneg %p149
        %p405 = pneg %p146
        %p406 = pneg %p170
        %p407 = pneg %p167
        %p408 = pneg %p191
        %p409 = pneg %p188
        %p410 = pneg %p212
        %p411 = pneg %p209
        %p412 = pneg %p238
        %p413 = pneg %p235
        %s414 = sand.u32 %s225, 1
        %s415 = scalar_lea.sflag [#allocation3], %s414
        %s416 = sand.u32 %s225, 1
        %s417 = smul.addr %s416, 8
        %s418 = scalar_lea.vmem [#allocation2], %s417
        %p419 = pneg %p264
        %p420 = pneg %p261
        %s421 = sand.u32 %s29, 1
        %s422 = scalar_lea.sflag [#allocation5], %s421
        %s423 = sand.u32 %s251, 1
        %s424 = smul.addr %s423, 8
        %s425 = scalar_lea.vmem [#allocation4], %s424
        %p426 = pneg %p290
        %p427 = pneg %p287
        %p428 = scmp.lt.s32.totalorder %s29, 1
        %s429 = scalar_select %p428, %s29, 1
        %s430 = smul.addr %s429, 8
        %s431 = scalar_lea.vmem %s10, %s430
        %p432 = pneg %p316
        %p433 = pneg %p313
        %s434 = sand.u32 %s29, 1
        %s435 = scalar_lea.sflag [#allocation5], %s434
        %s436 = sand.u32 %s303, 1
        %s437 = scalar_lea.vmem [#allocation6], %s436
        %p438 = scmp.lt.s32.totalorder %s29, 1
        %s439 = scalar_select %p438, %s29, 1
        %s440 = smul.addr %s439, 8
        %s441 = scalar_lea.vmem %s0, %s440
        %p442 = scmp.lt.s32.totalorder %s29, 1
        %s443 = scalar_select %p442, %s29, 1
        %s444 = smul.addr %s443, 8
        %s445 = scalar_lea.vmem %s1, %s444
        %p446 = scmp.lt.s32.totalorder %s29, 1
        %s447 = scalar_select %p446, %s29, 1
        %s448 = smul.addr %s447, 8
        %s449 = scalar_lea.vmem %s2, %s448
        %p450 = scmp.lt.s32.totalorder %s29, 1
        %s451 = scalar_select %p450, %s29, 1
        %s452 = scalar_lea.vmem %s3, %s451
        %p453 = scmp.lt.s32.totalorder %s29, 1
        %s454 = scalar_select %p453, %s29, 1
        %s455 = smul.addr %s454, 8
        %s456 = scalar_lea.vmem %s10, %s455
        %v458 = vld [vmem:[%s441] sm:$0xff]
        %v459 = vld [vmem:[%s445] sm:$0xff]
        %v460 = vpack.c.bf16 %v458, %v458
        %v461 = vpack.c.bf16 %v459, %v459
        %v462 = vld [vmem:[%s449] sm:$0xff]
        %464 = vset.pattern.permute.xlu0 0
        %465 = vperm.xlu0 %464, %v462
        %v466 = vpop.permute.xlu0 %465
        %468 = vmatprep.subr.bf16.mxu0 0
        %469 = vmatpush1.bf16.xpose.msra.mxu0 %v461
        %470 = vmatprep.subr.bf16.mxu0 0
        %471 = vmatpush1.bf16.xpose.msra.mxu0 0
        %472 = vmatprep.subr.bf16.mxu0 0
        %473 = vmatpush1.bf16.xpose.msra.mxu0 0
        %474 = vmatprep.subr.bf16.mxu0 0
        %475 = vmatpush1.bf16.xpose.msra.mxu0 0
        %476 = vmatprep.subr.bf16.mxu0 0
        %477 = vmatpush1.bf16.xpose.msra.mxu0 0
        %478 = vmatprep.subr.bf16.mxu0 0
        %479 = vmatpush1.bf16.xpose.msra.mxu0 0
        %480 = vmatprep.subr.bf16.mxu0 0
        %481 = vmatpush1.bf16.xpose.msra.mxu0 0
        %482 = vmatprep.subr.bf16.mxu0 0
        %483 = vmatpush1.bf16.xpose.msra.mxu0 0
        %484 = vmatprep.subr.bf16.mxu0 0
        %485 = vmatpush1.bf16.xpose.msra.mxu0 0
        %486 = vmatprep.subr.bf16.mxu0 0
        %487 = vmatpush1.bf16.xpose.msra.mxu0 0
        %488 = vmatprep.subr.bf16.mxu0 0
        %489 = vmatpush1.bf16.xpose.msra.mxu0 0
        %490 = vmatprep.subr.bf16.mxu0 0
        %491 = vmatpush1.bf16.xpose.msra.mxu0 0
        %492 = vmatprep.subr.bf16.mxu0 0
        %493 = vmatpush1.bf16.xpose.msra.mxu0 0
        %494 = vmatprep.subr.bf16.mxu0 0
        %495 = vmatpush1.bf16.xpose.msra.mxu0 0
        %496 = vmatprep.subr.bf16.mxu0 0
        %497 = vmatpush1.bf16.xpose.msra.mxu0 0
        %498 = vmatprep.subr.bf16.mxu0 0
        %499 = vmatpush1.bf16.xpose.msra.mxu0 0
        %500 = vmatprep.mubr.bf16.mxu0 0
        %501 = vmatmul.mubr.bf16.gmra.mrb[0].mxu0 %v460
        %v502 = vpop.f32.mrb[0].mxu0
        %v503 = vadd.f32 %v466, %v502
        %v504 = vpop.f32.mrb[0].mxu0
        %v505 = vpop.f32.mrb[0].mxu0
        %v506 = vpop.f32.mrb[0].mxu0
        %507 = vdwg.mxu0
        %v508 = vld [vmem:[%s452] sm:$0x1]
        %v510 = vlaneseq
        %v511 = vshrl.u32 %v510, 7
        %v512 = vsub.s32 0, %v511
        %v513 = vrot.slane %v508, %v512
        %v515 = vadd.f32 %v503, %v513
        %vm516 = vcmask 64512
        %v517 = vsel %vm516, %v515, -inf
        %518 = vmax.xlane.f32.xlu0 %v517
        %v519 = vpop.xlane.xlu0 %518
        %v520 = vrot.slane %v517, 4
        %v521 = vmax.f32 %v517, %v520
        %v522 = vrot.slane %v521, 2
        %v523 = vmax.f32 %v521, %v522
        %v524 = vrot.slane %v523, 1
        %v525 = vmax.f32 %v523, %v524
        %vm526 = vcmask 7168
        %527 = vst.msk [vmem:[%s456] sm:$0xff] %vm526, %v519
        %vm528 = vcmask 57344
        %529 = vst.msk [vmem:[%s437] sm:$0x1] %vm528, %v525
        %v530 = vsub.f32 %v515, %v519
        %v531 = vmul.f32 %v530, 1.442695
        %v532 = vpow.pop %v531
        %v533 = vsub.f32 %v515, %v525
        %v534 = vmul.f32 %v533, 1.442695
        %v535 = vpow.pop %v534
        %v536 = vsel %vm516, %v532, 0.0
        %537 = vadd.xlane.f32.xlu0 %v536
        %v538 = vpop.xlane.xlu0 %537
        %v539 = vrcp.pop %v538
        %v540 = vmul.f32 %v532, %v539
        %v541 = vsel %vm516, %v535, 0.0
        %v542 = vrot.slane %v541, 4
        %v543 = vadd.f32 %v541, %v542
        %v544 = vrot.slane %v543, 2
        %v545 = vadd.f32 %v543, %v544
        %v546 = vrot.slane %v545, 1
        %v547 = vadd.f32 %v545, %v546
        %v548 = vrcp.pop %v547
        %v549 = vmul.f32 %v535, %v548
        %v550 = vpack.c.bf16 %v540, %v540
        %v551 = vpack.c.bf16 %v549, %v549
        %v553 = vsel %vm516, %v550, 0
        %vm555 = vcmask 1043456
        %v557 = vsel %vm555, %v461, 0
        %559 = vmatprep.subr.bf16.mxu0 0
        %560 = vmatpush1.bf16.msra.mxu0 %v557
        %561 = vmatprep.subr.bf16.mxu0 0
        %562 = vmatpush1.bf16.msra.mxu0 0
        %563 = vmatprep.subr.bf16.mxu0 0
        %564 = vmatpush1.bf16.msra.mxu0 0
        %565 = vmatprep.subr.bf16.mxu0 0
        %566 = vmatpush1.bf16.msra.mxu0 0
        %567 = vmatprep.subr.bf16.mxu0 0
        %568 = vmatpush1.bf16.msra.mxu0 0
        %569 = vmatprep.subr.bf16.mxu0 0
        %570 = vmatpush1.bf16.msra.mxu0 0
        %571 = vmatprep.subr.bf16.mxu0 0
        %572 = vmatpush1.bf16.msra.mxu0 0
        %573 = vmatprep.subr.bf16.mxu0 0
        %574 = vmatpush1.bf16.msra.mxu0 0
        %575 = vmatprep.subr.bf16.mxu0 0
        %576 = vmatpush1.bf16.msra.mxu0 0
        %577 = vmatprep.subr.bf16.mxu0 0
        %578 = vmatpush1.bf16.msra.mxu0 0
        %579 = vmatprep.subr.bf16.mxu0 0
        %580 = vmatpush1.bf16.msra.mxu0 0
        %581 = vmatprep.subr.bf16.mxu0 0
        %582 = vmatpush1.bf16.msra.mxu0 0
        %583 = vmatprep.subr.bf16.mxu0 0
        %584 = vmatpush1.bf16.msra.mxu0 0
        %585 = vmatprep.subr.bf16.mxu0 0
        %586 = vmatpush1.bf16.msra.mxu0 0
        %587 = vmatprep.subr.bf16.mxu0 0
        %588 = vmatpush1.bf16.msra.mxu0 0
        %589 = vmatprep.subr.bf16.mxu0 0
        %590 = vmatpush1.bf16.msra.mxu0 0
        %591 = vmatprep.mubr.bf16.mxu0 0
        %592 = vmatmul.mubr.bf16.gmra.mrb[0].mxu0 %v553
        %v593 = vpop.f32.mrb[0].mxu0
        %v594 = vadd.f32 0.0, %v593
        %v595 = vpop.f32.mrb[0].mxu0
        %v596 = vpop.f32.mrb[0].mxu0
        %v597 = vpop.f32.mrb[0].mxu0
        %598 = vdwg.mxu0
        %599 = vxpose.xlu0.c.b16.start [1/8] %v551, 128
        %600 = vxpose.xlu0.c.b16.cont [2/8] 0, 128
        %601 = vxpose.xlu0.c.b16.cont [3/8] 0, 128
        %602 = vxpose.xlu0.c.b16.cont [4/8] 0, 128
        %603 = vxpose.xlu0.c.b16.cont [5/8] 0, 128
        %604 = vxpose.xlu0.c.b16.cont [6/8] 0, 128
        %605 = vxpose.xlu0.c.b16.cont [7/8] 0, 128
        %606 = vxpose.xlu0.c.b16.end [8/8] 0, 128
        %v607 = vpop.trf.xlu0
        %v608 = vpop.trf.xlu0
        %v609 = vpop.trf.xlu0
        %v610 = vpop.trf.xlu0
        %v611 = vpop.trf.xlu0
        %v612 = vpop.trf.xlu0
        %v613 = vpop.trf.xlu0
        %v614 = vpop.trf.xlu0
        %v616 = vsel %vm516, %v607, 0
        %v619 = vsel %vm555, %v460, 0
        %621 = vmatprep.subr.bf16.mxu0 0
        %622 = vmatpush1.bf16.msra.mxu0 %v619
        %623 = vmatprep.subr.bf16.mxu0 0
        %624 = vmatpush1.bf16.msra.mxu0 0
        %625 = vmatprep.subr.bf16.mxu0 0
        %626 = vmatpush1.bf16.msra.mxu0 0
        %627 = vmatprep.subr.bf16.mxu0 0
        %628 = vmatpush1.bf16.msra.mxu0 0
        %629 = vmatprep.subr.bf16.mxu0 0
        %630 = vmatpush1.bf16.msra.mxu0 0
        %631 = vmatprep.subr.bf16.mxu0 0
        %632 = vmatpush1.bf16.msra.mxu0 0
        %633 = vmatprep.subr.bf16.mxu0 0
        %634 = vmatpush1.bf16.msra.mxu0 0
        %635 = vmatprep.subr.bf16.mxu0 0
        %636 = vmatpush1.bf16.msra.mxu0 0
        %637 = vmatprep.subr.bf16.mxu0 0
        %638 = vmatpush1.bf16.msra.mxu0 0
        %639 = vmatprep.subr.bf16.mxu0 0
        %640 = vmatpush1.bf16.msra.mxu0 0
        %641 = vmatprep.subr.bf16.mxu0 0
        %642 = vmatpush1.bf16.msra.mxu0 0
        %643 = vmatprep.subr.bf16.mxu0 0
        %644 = vmatpush1.bf16.msra.mxu0 0
        %645 = vmatprep.subr.bf16.mxu0 0
        %646 = vmatpush1.bf16.msra.mxu0 0
        %647 = vmatprep.subr.bf16.mxu0 0
        %648 = vmatpush1.bf16.msra.mxu0 0
        %649 = vmatprep.subr.bf16.mxu0 0
        %650 = vmatpush1.bf16.msra.mxu0 0
        %651 = vmatprep.subr.bf16.mxu0 0
        %652 = vmatpush1.bf16.msra.mxu0 0
        %653 = vmatprep.mubr.bf16.mxu0 0
        %654 = vmatmul.mubr.bf16.gmra.mrb[0].mxu0 %v616
        %v655 = vpop.f32.mrb[0].mxu0
        %v656 = vadd.f32 0.0, %v655
        %v657 = vpop.f32.mrb[0].mxu0
        %v658 = vpop.f32.mrb[0].mxu0
        %v659 = vpop.f32.mrb[0].mxu0
        %660 = vdwg.mxu0
        %v661 = vpack.c.bf16 %v594, %v594
        %v662 = vpack.c.bf16 %v656, %v656
        %v664 = vsel %vm555, %v662, 0
        %666 = vmatprep.subr.bf16.mxu0 0
        %667 = vmatpush1.bf16.msra.mxu0 %v664
        %668 = vmatprep.subr.bf16.mxu0 0
        %669 = vmatpush1.bf16.msra.mxu0 0
        %670 = vmatprep.subr.bf16.mxu0 0
        %671 = vmatpush1.bf16.msra.mxu0 0
        %672 = vmatprep.subr.bf16.mxu0 0
        %673 = vmatpush1.bf16.msra.mxu0 0
        %674 = vmatprep.subr.bf16.mxu0 0
        %675 = vmatpush1.bf16.msra.mxu0 0
        %676 = vmatprep.subr.bf16.mxu0 0
        %677 = vmatpush1.bf16.msra.mxu0 0
        %678 = vmatprep.subr.bf16.mxu0 0
        %679 = vmatpush1.bf16.msra.mxu0 0
        %680 = vmatprep.subr.bf16.mxu0 0
        %681 = vmatpush1.bf16.msra.mxu0 0
        %682 = vmatprep.subr.bf16.mxu0 0
        %683 = vmatpush1.bf16.msra.mxu0 0
        %684 = vmatprep.subr.bf16.mxu0 0
        %685 = vmatpush1.bf16.msra.mxu0 0
        %686 = vmatprep.subr.bf16.mxu0 0
        %687 = vmatpush1.bf16.msra.mxu0 0
        %688 = vmatprep.subr.bf16.mxu0 0
        %689 = vmatpush1.bf16.msra.mxu0 0
        %690 = vmatprep.subr.bf16.mxu0 0
        %691 = vmatpush1.bf16.msra.mxu0 0
        %692 = vmatprep.subr.bf16.mxu0 0
        %693 = vmatpush1.bf16.msra.mxu0 0
        %694 = vmatprep.subr.bf16.mxu0 0
        %695 = vmatpush1.bf16.msra.mxu0 0
        %696 = vmatprep.subr.bf16.mxu0 0
        %697 = vmatpush1.bf16.msra.mxu0 0
        %698 = vmatprep.mubr.bf16.mxu0 0
        %699 = vmatmul.mubr.bf16.gmra.mrb[0].mxu0 %v553
        %v700 = vpop.f32.mrb[0].mxu0
        %v701 = vadd.f32 0.0, %v700
        %v702 = vpop.f32.mrb[0].mxu0
        %v703 = vpop.f32.mrb[0].mxu0
        %v704 = vpop.f32.mrb[0].mxu0
        %705 = vdwg.mxu0
        %v707 = vsel %vm555, %v661, 0
        %709 = vmatprep.subr.bf16.mxu0 0
        %710 = vmatpush1.bf16.msra.mxu0 %v707
        %711 = vmatprep.subr.bf16.mxu0 0
        %712 = vmatpush1.bf16.msra.mxu0 0
        %713 = vmatprep.subr.bf16.mxu0 0
        %714 = vmatpush1.bf16.msra.mxu0 0
        %715 = vmatprep.subr.bf16.mxu0 0
        %716 = vmatpush1.bf16.msra.mxu0 0
        %717 = vmatprep.subr.bf16.mxu0 0
        %718 = vmatpush1.bf16.msra.mxu0 0
        %719 = vmatprep.subr.bf16.mxu0 0
        %720 = vmatpush1.bf16.msra.mxu0 0
        %721 = vmatprep.subr.bf16.mxu0 0
        %722 = vmatpush1.bf16.msra.mxu0 0
        %723 = vmatprep.subr.bf16.mxu0 0
        %724 = vmatpush1.bf16.msra.mxu0 0
        %725 = vmatprep.subr.bf16.mxu0 0
        %726 = vmatpush1.bf16.msra.mxu0 0
        %727 = vmatprep.subr.bf16.mxu0 0
        %728 = vmatpush1.bf16.msra.mxu0 0
        %729 = vmatprep.subr.bf16.mxu0 0
        %730 = vmatpush1.bf16.msra.mxu0 0
        %731 = vmatprep.subr.bf16.mxu0 0
        %732 = vmatpush1.bf16.msra.mxu0 0
        %733 = vmatprep.subr.bf16.mxu0 0
        %734 = vmatpush1.bf16.msra.mxu0 0
        %735 = vmatprep.subr.bf16.mxu0 0
        %736 = vmatpush1.bf16.msra.mxu0 0
        %737 = vmatprep.subr.bf16.mxu0 0
        %738 = vmatpush1.bf16.msra.mxu0 0
        %739 = vmatprep.subr.bf16.mxu0 0
        %740 = vmatpush1.bf16.msra.mxu0 0
        %741 = vmatprep.mubr.bf16.mxu0 0
        %742 = vmatmul.mubr.bf16.gmra.mrb[0].mxu0 %v616
        %v743 = vpop.f32.mrb[0].mxu0
        %v744 = vadd.f32 0.0, %v743
        %v745 = vpop.f32.mrb[0].mxu0
        %v746 = vpop.f32.mrb[0].mxu0
        %v747 = vpop.f32.mrb[0].mxu0
        %748 = vdwg.mxu0
        %v749 = vpack.c.bf16 %v701, %v701
        %v750 = vpack.c.bf16 %v744, %v744
        %v751 = vld [vmem:[%s4] sm:$0xf]
        %v752 = vld [vmem:[%s4 + $0x4] sm:$0xf]
        %v753 = vld [vmem:[%s4 + $0x8] sm:$0xf]
        %v754 = vld [vmem:[%s4 + $0xc] sm:$0xf]
        %v755 = vld [vmem:[%s4 + $0x10] sm:$0xf]
        %v756 = vld [vmem:[%s4 + $0x14] sm:$0xf]
        %v757 = vld [vmem:[%s4 + $0x18] sm:$0xf]
        %v758 = vld [vmem:[%s4 + $0x1c] sm:$0xf]
        %v759 = vld [vmem:[%s4 + $0x20] sm:$0xf]
        %v760 = vld [vmem:[%s4 + $0x24] sm:$0xf]
        %v761 = vld [vmem:[%s4 + $0x28] sm:$0xf]
        %v762 = vld [vmem:[%s4 + $0x2c] sm:$0xf]
        %v763 = vld [vmem:[%s4 + $0x30] sm:$0xf]
        %v764 = vld [vmem:[%s4 + $0x34] sm:$0xf]
        %v765 = vld [vmem:[%s4 + $0x38] sm:$0xf]
        %v766 = vld [vmem:[%s4 + $0x3c] sm:$0xf]
        %v767 = vld [vmem:[%s4 + $0x40] sm:$0xf]
        %v768 = vld [vmem:[%s4 + $0x44] sm:$0xf]
        %v769 = vld [vmem:[%s4 + $0x48] sm:$0xf]
        %v770 = vld [vmem:[%s4 + $0x4c] sm:$0xf]
        %v771 = vld [vmem:[%s4 + $0x50] sm:$0xf]
        %v772 = vld [vmem:[%s4 + $0x54] sm:$0xf]
        %v773 = vld [vmem:[%s4 + $0x58] sm:$0xf]
        %v774 = vld [vmem:[%s4 + $0x5c] sm:$0xf]
        %v775 = vld [vmem:[%s4 + $0x60] sm:$0xf]
        %v776 = vld [vmem:[%s4 + $0x64] sm:$0xf]
        %v777 = vld [vmem:[%s4 + $0x68] sm:$0xf]
        %v778 = vld [vmem:[%s4 + $0x6c] sm:$0xf]
        %v779 = vld [vmem:[%s4 + $0x70] sm:$0xf]
        %v780 = vld [vmem:[%s4 + $0x74] sm:$0xf]
        %v781 = vld [vmem:[%s4 + $0x78] sm:$0xf]
        %v782 = vld [vmem:[%s4 + $0x7c] sm:$0xf]
        %v783 = vld [vmem:[%s5] sm:$0x1]
        %v785 = vlaneseq
        %v786 = vshrl.u32 %v785, 7
        %v787 = vsub.s32 0, %v786
        %v788 = vrot.slane %v783, %v787
        %v822 = vunpack.c.l.b16 %v751
        %v823 = vunpack.c.l.b16 %v752
        %v824 = vunpack.c.l.b16 %v753
        %v825 = vunpack.c.l.b16 %v754
        %v826 = vunpack.c.l.b16 %v755
        %v827 = vunpack.c.l.b16 %v756
        %v828 = vunpack.c.l.b16 %v757
        %v829 = vunpack.c.l.b16 %v758
        %v830 = vunpack.c.l.b16 %v759
        %v831 = vunpack.c.l.b16 %v760
        %v832 = vunpack.c.l.b16 %v761
        %v833 = vunpack.c.l.b16 %v762
        %v834 = vunpack.c.l.b16 %v763
        %v835 = vunpack.c.l.b16 %v764
        %v836 = vunpack.c.l.b16 %v765
        %v837 = vunpack.c.l.b16 %v766
        %v838 = vunpack.c.l.b16 %v767
        %v839 = vunpack.c.l.b16 %v768
        %v840 = vunpack.c.l.b16 %v769
        %v841 = vunpack.c.l.b16 %v770
        %v842 = vunpack.c.l.b16 %v771
        %v843 = vunpack.c.l.b16 %v772
        %v844 = vunpack.c.l.b16 %v773
        %v845 = vunpack.c.l.b16 %v774
        %v846 = vunpack.c.l.b16 %v775
        %v847 = vunpack.c.l.b16 %v776
        %v848 = vunpack.c.l.b16 %v777
        %v849 = vunpack.c.l.b16 %v778
        %v850 = vunpack.c.l.b16 %v779
        %v851 = vunpack.c.l.b16 %v780
        %v852 = vunpack.c.l.b16 %v781
        %v853 = vunpack.c.l.b16 %v782
        %v854 = vpack.c.b16 %v823, %v822
        %v855 = vpack.c.b16 %v825, %v824
        %v856 = vpack.c.b16 %v827, %v826
        %v857 = vpack.c.b16 %v829, %v828
        %v858 = vpack.c.b16 %v831, %v830
        %v859 = vpack.c.b16 %v833, %v832
        %v860 = vpack.c.b16 %v835, %v834
        %v861 = vpack.c.b16 %v837, %v836
        %v862 = vpack.c.b16 %v839, %v838
        %v863 = vpack.c.b16 %v841, %v840
        %v864 = vpack.c.b16 %v843, %v842
        %v865 = vpack.c.b16 %v845, %v844
        %v866 = vpack.c.b16 %v847, %v846
        %v867 = vpack.c.b16 %v849, %v848
        %v868 = vpack.c.b16 %v851, %v850
        %v869 = vpack.c.b16 %v853, %v852
        %886 = vmatprep.subr.bf16.mxu0 0
        %887 = vmatpush1.bf16.msra.mxu0 %v854
        %888 = vmatprep.subr.bf16.mxu0 0
        %889 = vmatpush1.bf16.msra.mxu0 %v855
        %890 = vmatprep.subr.bf16.mxu0 0
        %891 = vmatpush1.bf16.msra.mxu0 %v856
        %892 = vmatprep.subr.bf16.mxu0 0
        %893 = vmatpush1.bf16.msra.mxu0 %v857
        %894 = vmatprep.subr.bf16.mxu0 0
        %895 = vmatpush1.bf16.msra.mxu0 %v858
        %896 = vmatprep.subr.bf16.mxu0 0
        %897 = vmatpush1.bf16.msra.mxu0 %v859
        %898 = vmatprep.subr.bf16.mxu0 0
        %899 = vmatpush1.bf16.msra.mxu0 %v860
        %900 = vmatprep.subr.bf16.mxu0 0
        %901 = vmatpush1.bf16.msra.mxu0 %v861
        %902 = vmatprep.subr.bf16.mxu0 0
        %903 = vmatpush1.bf16.msra.mxu0 %v862
        %904 = vmatprep.subr.bf16.mxu0 0
        %905 = vmatpush1.bf16.msra.mxu0 %v863
        %906 = vmatprep.subr.bf16.mxu0 0
        %907 = vmatpush1.bf16.msra.mxu0 %v864
        %908 = vmatprep.subr.bf16.mxu0 0
        %909 = vmatpush1.bf16.msra.mxu0 %v865
        %910 = vmatprep.subr.bf16.mxu0 0
        %911 = vmatpush1.bf16.msra.mxu0 %v866
        %912 = vmatprep.subr.bf16.mxu0 0
        %913 = vmatpush1.bf16.msra.mxu0 %v867
        %914 = vmatprep.subr.bf16.mxu0 0
        %915 = vmatpush1.bf16.msra.mxu0 %v868
        %916 = vmatprep.subr.bf16.mxu0 0
        %917 = vmatpush1.bf16.msra.mxu0 %v869
        %918 = vmatprep.mubr.bf16.mxu0 %v661
        %919 = vmatmul.mubr.bf16.gmra.mrb[0].mxu0 %v749
        %v920 = vpop.f32.mrb[0].mxu0
        %v921 = vadd.f32 %v788, %v920
        %v922 = vpop.f32.mrb[0].mxu0
        %v923 = vpop.f32.mrb[0].mxu0
        %v924 = vpop.f32.mrb[0].mxu0
        %925 = vdwg.mxu0
        %v926 = vld [vmem:[%s6] sm:$0xf]
        %v927 = vld [vmem:[%s6 + $0x4] sm:$0xf]
        %v928 = vld [vmem:[%s6 + $0x8] sm:$0xf]
        %v929 = vld [vmem:[%s6 + $0xc] sm:$0xf]
        %v930 = vld [vmem:[%s6 + $0x10] sm:$0xf]
        %v931 = vld [vmem:[%s6 + $0x14] sm:$0xf]
        %v932 = vld [vmem:[%s6 + $0x18] sm:$0xf]
        %v933 = vld [vmem:[%s6 + $0x1c] sm:$0xf]
        %v934 = vld [vmem:[%s6 + $0x20] sm:$0xf]
        %v935 = vld [vmem:[%s6 + $0x24] sm:$0xf]
        %v936 = vld [vmem:[%s6 + $0x28] sm:$0xf]
        %v937 = vld [vmem:[%s6 + $0x2c] sm:$0xf]
        %v938 = vld [vmem:[%s6 + $0x30] sm:$0xf]
        %v939 = vld [vmem:[%s6 + $0x34] sm:$0xf]
        %v940 = vld [vmem:[%s6 + $0x38] sm:$0xf]
        %v941 = vld [vmem:[%s6 + $0x3c] sm:$0xf]
        %v942 = vld [vmem:[%s6 + $0x40] sm:$0xf]
        %v943 = vld [vmem:[%s6 + $0x44] sm:$0xf]
        %v944 = vld [vmem:[%s6 + $0x48] sm:$0xf]
        %v945 = vld [vmem:[%s6 + $0x4c] sm:$0xf]
        %v946 = vld [vmem:[%s6 + $0x50] sm:$0xf]
        %v947 = vld [vmem:[%s6 + $0x54] sm:$0xf]
        %v948 = vld [vmem:[%s6 + $0x58] sm:$0xf]
        %v949 = vld [vmem:[%s6 + $0x5c] sm:$0xf]
        %v950 = vld [vmem:[%s6 + $0x60] sm:$0xf]
        %v951 = vld [vmem:[%s6 + $0x64] sm:$0xf]
        %v952 = vld [vmem:[%s6 + $0x68] sm:$0xf]
        %v953 = vld [vmem:[%s6 + $0x6c] sm:$0xf]
        %v954 = vld [vmem:[%s6 + $0x70] sm:$0xf]
        %v955 = vld [vmem:[%s6 + $0x74] sm:$0xf]
        %v956 = vld [vmem:[%s6 + $0x78] sm:$0xf]
        %v957 = vld [vmem:[%s6 + $0x7c] sm:$0xf]
        %v958 = vld [vmem:[%s7] sm:$0x1]
        %v960 = vlaneseq
        %v961 = vshrl.u32 %v960, 7
        %v962 = vsub.s32 0, %v961
        %v963 = vrot.slane %v958, %v962
        %v997 = vunpack.c.l.b16 %v926
        %v998 = vunpack.c.l.b16 %v927
        %v999 = vunpack.c.l.b16 %v928
        %v1000 = vunpack.c.l.b16 %v929
        %v1001 = vunpack.c.l.b16 %v930
        %v1002 = vunpack.c.l.b16 %v931
        %v1003 = vunpack.c.l.b16 %v932
        %v1004 = vunpack.c.l.b16 %v933
        %v1005 = vunpack.c.l.b16 %v934
        %v1006 = vunpack.c.l.b16 %v935
        %v1007 = vunpack.c.l.b16 %v936
        %v1008 = vunpack.c.l.b16 %v937
        %v1009 = vunpack.c.l.b16 %v938
        %v1010 = vunpack.c.l.b16 %v939
        %v1011 = vunpack.c.l.b16 %v940
        %v1012 = vunpack.c.l.b16 %v941
        %v1013 = vunpack.c.l.b16 %v942
        %v1014 = vunpack.c.l.b16 %v943
        %v1015 = vunpack.c.l.b16 %v944
        %v1016 = vunpack.c.l.b16 %v945
        %v1017 = vunpack.c.l.b16 %v946
        %v1018 = vunpack.c.l.b16 %v947
        %v1019 = vunpack.c.l.b16 %v948
        %v1020 = vunpack.c.l.b16 %v949
        %v1021 = vunpack.c.l.b16 %v950
        %v1022 = vunpack.c.l.b16 %v951
        %v1023 = vunpack.c.l.b16 %v952
        %v1024 = vunpack.c.l.b16 %v953
        %v1025 = vunpack.c.l.b16 %v954
        %v1026 = vunpack.c.l.b16 %v955
        %v1027 = vunpack.c.l.b16 %v956
        %v1028 = vunpack.c.l.b16 %v957
        %v1029 = vpack.c.b16 %v998, %v997
        %v1030 = vpack.c.b16 %v1000, %v999
        %v1031 = vpack.c.b16 %v1002, %v1001
        %v1032 = vpack.c.b16 %v1004, %v1003
        %v1033 = vpack.c.b16 %v1006, %v1005
        %v1034 = vpack.c.b16 %v1008, %v1007
        %v1035 = vpack.c.b16 %v1010, %v1009
        %v1036 = vpack.c.b16 %v1012, %v1011
        %v1037 = vpack.c.b16 %v1014, %v1013
        %v1038 = vpack.c.b16 %v1016, %v1015
        %v1039 = vpack.c.b16 %v1018, %v1017
        %v1040 = vpack.c.b16 %v1020, %v1019
        %v1041 = vpack.c.b16 %v1022, %v1021
        %v1042 = vpack.c.b16 %v1024, %v1023
        %v1043 = vpack.c.b16 %v1026, %v1025
        %v1044 = vpack.c.b16 %v1028, %v1027
        %1061 = vmatprep.subr.bf16.mxu0 0
        %1062 = vmatpush1.bf16.msra.mxu0 %v1029
        %1063 = vmatprep.subr.bf16.mxu0 0
        %1064 = vmatpush1.bf16.msra.mxu0 %v1030
        %1065 = vmatprep.subr.bf16.mxu0 0
        %1066 = vmatpush1.bf16.msra.mxu0 %v1031
        %1067 = vmatprep.subr.bf16.mxu0 0
        %1068 = vmatpush1.bf16.msra.mxu0 %v1032
        %1069 = vmatprep.subr.bf16.mxu0 0
        %1070 = vmatpush1.bf16.msra.mxu0 %v1033
        %1071 = vmatprep.subr.bf16.mxu0 0
        %1072 = vmatpush1.bf16.msra.mxu0 %v1034
        %1073 = vmatprep.subr.bf16.mxu0 0
        %1074 = vmatpush1.bf16.msra.mxu0 %v1035
        %1075 = vmatprep.subr.bf16.mxu0 0
        %1076 = vmatpush1.bf16.msra.mxu0 %v1036
        %1077 = vmatprep.subr.bf16.mxu0 0
        %1078 = vmatpush1.bf16.msra.mxu0 %v1037
        %1079 = vmatprep.subr.bf16.mxu0 0
        %1080 = vmatpush1.bf16.msra.mxu0 %v1038
        %1081 = vmatprep.subr.bf16.mxu0 0
        %1082 = vmatpush1.bf16.msra.mxu0 %v1039
        %1083 = vmatprep.subr.bf16.mxu0 0
        %1084 = vmatpush1.bf16.msra.mxu0 %v1040
        %1085 = vmatprep.subr.bf16.mxu0 0
        %1086 = vmatpush1.bf16.msra.mxu0 %v1041
        %1087 = vmatprep.subr.bf16.mxu0 0
        %1088 = vmatpush1.bf16.msra.mxu0 %v1042
        %1089 = vmatprep.subr.bf16.mxu0 0
        %1090 = vmatpush1.bf16.msra.mxu0 %v1043
        %1091 = vmatprep.subr.bf16.mxu0 0
        %1092 = vmatpush1.bf16.msra.mxu0 %v1044
        %1093 = vmatprep.mubr.bf16.mxu0 %v662
        %1094 = vmatmul.mubr.bf16.gmra.mrb[0].mxu0 %v750
        %v1095 = vpop.f32.mrb[0].mxu0
        %v1096 = vadd.f32 %v963, %v1095
        %v1097 = vpop.f32.mrb[0].mxu0
        %v1098 = vpop.f32.mrb[0].mxu0
        %v1099 = vpop.f32.mrb[0].mxu0
        %1100 = vdwg.mxu0
        %v1101 = vadd.f32 %v458, %v921
        %v1102 = vadd.f32 %v459, %v1096
        %1103 = vadd.xlane.f32.xlu0 %v1101
        %v1104 = vpop.xlane.xlu0 %1103
        %v1105 = vrot.slane %v1104, 4
        %v1106 = vadd.f32 %v1104, %v1105
        %v1107 = vrot.slane %v1106, 2
        %v1108 = vadd.f32 %v1106, %v1107
        %v1109 = vrot.slane %v1108, 1
        %v1110 = vadd.f32 %v1108, %v1109
        %s1111 = vtos %v1110
        %s1112 = smul.f32 %s1111, 0.00390625
        %v1113 = vmul.f32 %v1101, %v1101
        %1114 = vadd.xlane.f32.xlu0 %v1113
        %v1115 = vpop.xlane.xlu0 %1114
        %v1116 = vrot.slane %v1115, 4
        %v1117 = vadd.f32 %v1115, %v1116
        %v1118 = vrot.slane %v1117, 2
        %v1119 = vadd.f32 %v1117, %v1118
        %v1120 = vrot.slane %v1119, 1
        %v1121 = vadd.f32 %v1119, %v1120
        %s1122 = vtos %v1121
        %s1123 = smul.f32 %s1122, 0.00390625
        %s1124 = smul.f32 %s1112, %s1112
        %s1125 = ssub.f32 %s1123, %s1124
        %v1126 = vstv %s1112
        %v1127 = vsub.f32 %v1101, %v1126
        %s1128 = sadd.f32 %s1125, 1e-05
        %v1129 = vstv %s1128
        %v1130 = vrsqrt.pop %v1129
        %s1131 = vtos %v1130
        %v1132 = vstv %s1131
        %v1133 = vmul.f32 %v1127, %v1132
        %1134 = vst [vmem:[%s418] sm:$0xff] %v1133
        %1135 = vadd.xlane.f32.xlu0 %v1102
        %v1136 = vpop.xlane.xlu0 %1135
        %v1137 = vrot.slane %v1136, 4
        %v1138 = vadd.f32 %v1136, %v1137
        %v1139 = vrot.slane %v1138, 2
        %v1140 = vadd.f32 %v1138, %v1139
        %v1141 = vrot.slane %v1140, 1
        %v1142 = vadd.f32 %v1140, %v1141
        %s1143 = vtos %v1142
        %s1144 = smul.f32 %s1143, 0.00390625
        %v1145 = vmul.f32 %v1102, %v1102
        %1146 = vadd.xlane.f32.xlu0 %v1145
        %v1147 = vpop.xlane.xlu0 %1146
        %v1148 = vrot.slane %v1147, 4
        %v1149 = vadd.f32 %v1147, %v1148
        %v1150 = vrot.slane %v1149, 2
        %v1151 = vadd.f32 %v1149, %v1150
        %v1152 = vrot.slane %v1151, 1
        %v1153 = vadd.f32 %v1151, %v1152
        %s1154 = vtos %v1153
        %s1155 = smul.f32 %s1154, 0.00390625
        %s1156 = smul.f32 %s1144, %s1144
        %s1157 = ssub.f32 %s1155, %s1156
        %v1158 = vstv %s1144
        %v1159 = vsub.f32 %v1102, %v1158
        %s1160 = sadd.f32 %s1157, 1e-05
        %v1161 = vstv %s1160
        %v1162 = vrsqrt.pop %v1161
        %s1163 = vtos %v1162
        %v1164 = vstv %s1163
        %v1165 = vmul.f32 %v1159, %v1164
        %1166 = vst [vmem:[%s425] sm:$0xff] %v1165
        %s1167 = sand.u32 %s225, 1
        %s1168 = scalar_lea.sflag [#allocation3], %s1167
        %s1169 = sand.u32 %s225, 1
        %s1170 = smul.addr %s1169, 8
        %s1171 = scalar_lea.vmem [#allocation2], %s1170
        %s1172 = sand.u32 %s29, 1
        %s1173 = scalar_lea.sflag [#allocation5], %s1172
        %s1174 = sand.u32 %s251, 1
        %s1175 = smul.addr %s1174, 8
        %s1176 = scalar_lea.vmem [#allocation4], %s1175
        %p1177 = scmp.lt.s32.totalorder %s29, 1
        %s1178 = scalar_select %p1177, %s29, 1
        %s1179 = smul.addr %s1178, 8
        %s1180 = scalar_lea.vmem %s10, %s1179
        %s1181 = sand.u32 %s29, 1
        %s1182 = scalar_lea.sflag [#allocation5], %s1181
        %s1183 = sand.u32 %s303, 1
        %s1184 = scalar_lea.vmem [#allocation6], %s1183
        // Predicated region
        $region53: #{dpda_layer.1} parent=51 // pred_check
          %p1185 = pneg %p235
        $region54: #{dpda_layer.1} parent=51 // pred_check_branch
          %1187 = sbr.rel (%p1185) target = $region56
        $region55: #{dpda_layer.1} parent=51 // pred_region
          %s1189 = ssub.s32 128, 128
          %1190 = vsyncadd %s1168, %s1189
          %s1191 = smul.addr %s29, 128
          %s1192 = scalar_lea.hbm %s8, %s1191
          %s1194 = sshll.u32 %s1171, 4
          %s1195 = int_to_ptr.vmem [resolvable:$true] %s1194
          %1197 = dma.vmem_to_hbm [thread:$0]  %s1195, 128, %s1192, %s1168
        $region56: #{dpda_layer.1} parent=51 // pred_fallthru
          _
        // Predicated region
        $region57: #{dpda_layer.1} parent=51 // pred_check
          %p1198 = pneg %p261
        $region58: #{dpda_layer.1} parent=51 // pred_check_branch
          %1200 = sbr.rel (%p1198) target = $region60
        $region59: #{dpda_layer.1} parent=51 // pred_region
          %s1202 = ssub.s32 128, 128
          %1203 = vsyncadd %s1173, %s1202
          %s1204 = smul.addr %s29, 128
          %s1205 = scalar_lea.hbm %s9, %s1204
          %s1207 = sshll.u32 %s1176, 4
          %s1208 = int_to_ptr.vmem [resolvable:$true] %s1207
          %1210 = dma.vmem_to_hbm [thread:$0]  %s1208, 128, %s1205, %s1173
        $region60: #{dpda_layer.1} parent=51 // pred_fallthru
          _
        // Predicated region
        $region61: #{dpda_layer.1} parent=51 // pred_check
          %p1211 = pneg %p287
        $region62: #{dpda_layer.1} parent=51 // pred_check_branch
          %1213 = sbr.rel (%p1211) target = $region64
        $region63: #{dpda_layer.1} parent=51 // pred_region
          _
        $region64: #{dpda_layer.1} parent=51 // pred_fallthru
          _
        // Predicated region
        $region65: #{dpda_layer.1} parent=51 // pred_check
          %p1214 = pneg %p313
        $region66: #{dpda_layer.1} parent=51 // pred_check_branch
          %1216 = sbr.rel (%p1214) target = $region68
        $region67: #{dpda_layer.1} parent=51 // pred_region
          %s1218 = ssub.s32 16, 16
          %1219 = vsyncadd %s1182, %s1218
          %s1220 = smul.addr %s29, 16
          %s1221 = scalar_lea.hbm %s11, %s1220
          %s1223 = sshll.u32 %s1184, 4
          %s1224 = int_to_ptr.vmem [resolvable:$true] %s1223
          %1226 = dma.vmem_to_hbm [thread:$0]  %s1224, 16, %s1221, %s1182
        $region68: #{dpda_layer.1} parent=51 // pred_fallthru
          _
      $region52: #{dpda_layer.1} parent=5 // pred_fallthru
        _
      %p1227 = scmp.le.s32.totalorder 2, %s24
      // Predicated region
      $region69: #{dpda_layer.1} parent=5 // pred_check
        %p1228 = pneg %p1227
      $region70: #{dpda_layer.1} parent=5 // pred_check_branch
        %1230 = sbr.rel (%p1228) target = $region72
      $region71: #{dpda_layer.1} parent=5 // pred_region
        %s1231 = ssub.s32 %s24, 2
        // Predicated region
        $region73: #{dpda_layer.1} parent=71 // pred_check
          %p1232 = pneg %p241
        $region74: #{dpda_layer.1} parent=71 // pred_check_branch
          %1234 = sbr.rel (%p1232) target = $region76
        $region75: #{dpda_layer.1} parent=71 // pred_region
          %s1235 = sand.u32 %s226, 1
          %s1236 = scalar_lea.sflag [#allocation3], %s1235
          %s1237 = sand.u32 %s226, 1
          %s1238 = smul.addr %s1237, 8
          %s1239 = scalar_lea.vmem [#allocation2], %s1238
          %1240 = dma.done %s1236, 128
        $region76: #{dpda_layer.1} parent=71 // pred_fallthru
          _
        // Predicated region
        $region77: #{dpda_layer.1} parent=71 // pred_check
          %p1241 = pneg %p267
        $region78: #{dpda_layer.1} parent=71 // pred_check_branch
          %1243 = sbr.rel (%p1241) target = $region80
        $region79: #{dpda_layer.1} parent=71 // pred_region
          %s1244 = sand.u32 %s30, 1
          %s1245 = scalar_lea.sflag [#allocation5], %s1244
          %s1246 = sand.u32 %s252, 1
          %s1247 = smul.addr %s1246, 8
          %s1248 = scalar_lea.vmem [#allocation4], %s1247
          %1249 = dma.done %s1245, 128
        $region80: #{dpda_layer.1} parent=71 // pred_fallthru
          _
        // Predicated region
        $region81: #{dpda_layer.1} parent=71 // pred_check
          %p1250 = pneg %p293
        $region82: #{dpda_layer.1} parent=71 // pred_check_branch
          %1252 = sbr.rel (%p1250) target = $region84
        $region83: #{dpda_layer.1} parent=71 // pred_region
          %p1253 = scmp.lt.s32.totalorder %s30, 1
          %s1254 = scalar_select %p1253, %s30, 1
          %s1255 = smul.addr %s1254, 8
          %s1256 = scalar_lea.vmem %s10, %s1255
        $region84: #{dpda_layer.1} parent=71 // pred_fallthru
          _
        // Predicated region
        $region85: #{dpda_layer.1} parent=71 // pred_check
          %p1257 = pneg %p319
        $region86: #{dpda_layer.1} parent=71 // pred_check_branch
          %1259 = sbr.rel (%p1257) target = $region88
        $region87: #{dpda_layer.1} parent=71 // pred_region
          %s1260 = sand.u32 %s30, 1
          %s1261 = scalar_lea.sflag [#allocation5], %s1260
          %s1262 = sand.u32 %s304, 1
          %s1263 = scalar_lea.vmem [#allocation6], %s1262
          %1264 = dma.done %s1261, 16
        $region88: #{dpda_layer.1} parent=71 // pred_fallthru
          _
      $region72: #{dpda_layer.1} parent=5 // pred_fallthru
        _
    $region6: #{dpda_layer.1} parent=1 // loop_footer
      %s28 = sadd.s32 1, %s24
    $region7: #{dpda_layer.1} parent=1 // loop_footer_branch
      %23 = sbr.rel target = $region3
    $region8: #{dpda_layer.1} parent=1 // loop_exit
      _
    %1265 = vsyncpa [#allocation3], 1
    %s1266 = scalar_lea.sflag [#allocation3], 1
    %1267 = vsyncpa %s1266, 1
    %1268 = vsyncpa [#allocation5], 1
    %s1269 = scalar_lea.sflag [#allocation5], 1
    %1270 = vsyncpa %s1269, 1

</llo_original>
